<compile_context>
chip_gen: v7x
topology: tpu7x:2x2x1
jax: 0.10.0
libtpu: 0.0.40
codegen_flags: <defaults>
</compile_context>

<pallas_src>
import jax
import jax.numpy as jnp
from jax import lax
from jax.experimental import pallas as pl
from jax.experimental.pallas import tpu as pltpu


def _round_up(n, m):
    return ((n + m - 1) // m) * m


def _bf16_eup_supported():
    """bf16 transcendentals pay off on v6e/v7x (bf16 EUP); not on v5e/older."""
    try:
        kind = jax.devices()[0].device_kind.lower()
    except Exception:
        return False
    return ("v6" in kind) or ("v7" in kind)


def _vmem_capacity_bytes():
    try:
        return int(pltpu.get_tpu_info().vmem_capacity_bytes)
    except Exception:
        return 64 * 2**20  # conservative fallback: v7x physical VMEM per TC


def _make_lstm_kernel(hidden_size, use_bf16_eup):
    H = hidden_size

    def _softmax_lastdim(z):
        m = jnp.max(z, axis=-1, keepdims=True)
        zc = z - m
        if use_bf16_eup:
            e = jnp.exp(zc.astype(jnp.bfloat16)).astype(jnp.float32)
        else:
            e = jnp.exp(zc)
        denom = jnp.sum(e, axis=-1, keepdims=True)
        # Approximate reciprocal runs on the otherwise-idle EUP slot.
        return e * pl.reciprocal(denom, approx=True)

    def _tanh(z):
        if use_bf16_eup:
            return jnp.tanh(z.astype(jnp.bfloat16)).astype(jnp.float32)
        return jnp.tanh(z)

    def kernel(x_ref, hprev_ref, cprev_ref, wx_ref, wh_ref, b_ref,
               h_ref, c_ref):
        # gates = concat([x, h_prev]) @ W + b, computed without materializing
        # the concat: x @ W[:I] + h_prev @ W[I:]. bf16 inputs, f32 accumulate
        # (single MXU pass on every generation).
        x = x_ref[...].astype(jnp.bfloat16)
        h_prev = hprev_ref[...].astype(jnp.bfloat16)
        gates = (
            jnp.dot(x, wx_ref[...], preferred_element_type=jnp.float32)
            + jnp.dot(h_prev, wh_ref[...], preferred_element_type=jnp.float32)
            + b_ref[...].astype(jnp.float32)
        )  # (tile_m, 4H) f32

        # TODO(synk): for H >= 256, compute the four gates as separate
        # (tile_m, H) matmuls against per-gate weight column blocks so every
        # slice is lane-dense; for tiny I+H (< MXU K pass width) an in-kernel
        # concat + single K=(I+H) matmul would halve MXU pushes.
        f_gate = _softmax_lastdim(gates[:, 0 * H:1 * H])
        i_gate = _softmax_lastdim(gates[:, 1 * H:2 * H])
        g_gate = _tanh(gates[:, 2 * H:3 * H])
        o_gate = _softmax_lastdim(gates[:, 3 * H:4 * H])

        c_new = cprev_ref[...].astype(jnp.float32) * f_gate + i_gate * g_gate
        h_new = _tanh(c_new) * o_gate

        h_ref[...] = h_new.astype(h_ref.dtype)
        c_ref[...] = c_new.astype(c_ref.dtype)

    return kernel


def _choose_tile_m(M, per_row_vmem, per_row_hbm, weight_vmem, usable_vmem):
    if M <= 8:
        return M  # whole row axis in one (full-dim) block
    avail = max(usable_vmem - weight_vmem - (4 << 20), 1 << 20)
    max_by_vmem = max(8, (avail // max(per_row_vmem, 1)) // 8 * 8)
    # Amortize ~0.35 us per-grid-step overhead: aim for >= 2 MiB of HBM
    # traffic per tile, clamped to [256, 2048] rows.
    target = _round_up(max(256, (2 << 20) // max(per_row_hbm, 1)), 8)
    target = min(target, 2048)
    tile_m = max(8, min(target, max_by_vmem, _round_up(M, 8)))
    # v7x has 2 TensorCores: keep at least 2 grid steps when there is work.
    if pl.cdiv(M, tile_m) < 2:
        tile_m = max(8, _round_up(pl.cdiv(M, 2), 8))
    return tile_m


def lstm_core_forward(x, h_prev, c_prev, W, b, *, tile_m=None):
    """Pallas equivalent of LSTMCore.forward.

    x:      (B, S, input_size)
    h_prev: (B, S, hidden_size)   (= state[0])
    c_prev: (B, S, hidden_size)   (= state[1])
    W:      (hidden_size + input_size, 4 * hidden_size)
    b:      (1, 4 * hidden_size)
    returns (h, [h, c]) with h, c of shape (B, S, hidden_size)
    """
    B, S, I = x.shape
    H = h_prev.shape[-1]
    M = B * S

    # Rows [0:I) of W multiply x, rows [I:I+H) multiply h_prev (== concat @ W).
    # Stored bf16: single MXU pass, half the resident VMEM / HBM bytes.
    Wx = W[:I, :].astype(jnp.bfloat16)
    Wh = W[I:, :].astype(jnp.bfloat16)
    b2 = b.astype(jnp.float32)

    # TODO(synk): when H >= 128 and H % 128 != 0, pad the hidden dim to a
    # multiple of 128 (zero-padded W columns, -inf padded bias) so gate
    # slices / softmax reductions / h,c stores are lane-dense; for the tiny
    # H=32 test padding to 128 would quadruple activation traffic, so skip.

    x2d = x.reshape(M, I)
    h2d = h_prev.reshape(M, H)
    c2d = c_prev.reshape(M, H)

    xb, hb, cb = x2d.dtype.itemsize, h2d.dtype.itemsize, c2d.dtype.itemsize
    hob, cob = h_prev.dtype.itemsize, c_prev.dtype.itemsize

    usable_vmem = _vmem_capacity_bytes() - (16 << 20)
    weight_vmem = ((I + H) * 4 * H * Wx.dtype.itemsize
                   + 4 * H * b2.dtype.itemsize)
    if weight_vmem > usable_vmem // 2:
        # TODO(synk): add a column-tiled (per-gate / 4H-blocked) grid axis so
        # weights need not be fully VMEM-resident for large H.
        raise NotImplementedError(
            "resident-weight path needs (I+H)*4H weights to fit in VMEM "
            f"({weight_vmem} bytes vs budget {usable_vmem // 2})")

    per_row_vmem = (2 * (I * xb + H * hb + H * cb)   # double-buffered inputs
                    + 2 * (H * hob + H * cob)        # double-buffered outputs
                    + 3 * 4 * H * 4)                 # f32 gates + temporaries
    per_row_hbm = I * xb + H * (hb + cb + hob + cob)

    if tile_m is None:
        tile_m = _choose_tile_m(M, per_row_vmem, per_row_hbm,
                                weight_vmem, usable_vmem)
    grid = (pl.cdiv(M, tile_m),)

    vmem_limit = int(min(usable_vmem,
                         weight_vmem + tile_m * per_row_vmem + (8 << 20)))
    vmem_limit = max(vmem_limit, 32 << 20)

    kernel = _make_lstm_kernel(H, _bf16_eup_supported())

    def row_spec(feat):
        return pl.BlockSpec((tile_m, feat), lambda i: (i, 0))

    def call(weight_pipeline_mode):
        if weight_pipeline_mode is None:
            def w_spec(shape):
                return pl.BlockSpec(shape, lambda i: (0, 0))
        else:
            def w_spec(shape):
                return pl.BlockSpec(shape, lambda i: (0, 0),
                                    pipeline_mode=weight_pipeline_mode)
        out = pl.pallas_call(
            kernel,
            grid=grid,
            in_specs=[
                row_spec(I),                 # x tile
                row_spec(H),                 # h_prev tile
                row_spec(H),                 # c_prev tile
                w_spec((I, 4 * H)),          # Wx (VMEM-resident)
                w_spec((H, 4 * H)),          # Wh (VMEM-resident)
                w_spec((1, 4 * H)),          # b  (VMEM-resident)
            ],
            out_specs=(row_spec(H), row_spec(H)),
            out_shape=(
                jax.ShapeDtypeStruct((M, H), h_prev.dtype),
                jax.ShapeDtypeStruct((M, H), c_prev.dtype),
            ),
            compiler_params=pltpu.CompilerParams(
                dimension_semantics=("parallel",),
                vmem_limit_bytes=vmem_limit,
            ),
        )(x2d, h2d, c2d, Wx, Wh, b2)
        return jax.block_until_ready(out)

    try:
        # Single-buffer the constant-index weight blocks (halves their VMEM).
        h2d_new, c2d_new = call(pl.Buffered(1))
    except Exception:
        # Robustness fallback if single-buffered pipeline_mode is unavailable.
        h2d_new, c2d_new = call(None)

    h = h2d_new.reshape(B, S, H)
    c = c2d_new.reshape(B, S, H)
    return h, [h, c]


def _reference_forward(x, h_prev, c_prev, W, b, *, matmul_dtype=None):
    """Pure-JAX port of LSTMCore.forward (gold reference)."""
    concat = jnp.concatenate([x, h_prev], axis=-1)
    if matmul_dtype is None:
        gates = jnp.matmul(concat, W, precision=lax.Precision.HIGHEST) + b
    else:
        gates = jnp.matmul(concat.astype(matmul_dtype),
                           W.astype(matmul_dtype),
                           preferred_element_type=jnp.float32) + b
    f_lin, i_lin, g_lin, o_lin = jnp.split(gates, 4, axis=2)
    f = jax.nn.softmax(f_lin, axis=2)
    i = jax.nn.softmax(i_lin, axis=2)
    o = jax.nn.softmax(o_lin, axis=2)
    g = jnp.tanh(g_lin)
    c = c_prev * f + i * g
    h = jnp.tanh(c) * o
    return h, c


if __name__ == "__main__":
    B, S = 2, 8
    input_size, hidden_size = 16, 32

    key = jax.random.PRNGKey(0)
    k_w, k_b, k_x, k_h, k_c = jax.random.split(key, 5)

    # torch.rand -> uniform [0, 1); deterministic synthetic init.
    W = jax.random.uniform(k_w, (hidden_size + input_size, 4 * hidden_size),
                           jnp.float32)
    b = jax.random.uniform(k_b, (1, 4 * hidden_size), jnp.float32)
    x = jax.random.uniform(k_x, (B, S, input_size), jnp.float32)
    h0 = jax.random.uniform(k_h, (B, S, hidden_size), jnp.float32)
    c0 = jax.random.uniform(k_c, (B, S, hidden_size), jnp.float32)

    h, (h_state, c_state) = lstm_core_forward(x, h0, c0, W, b)
    jax.block_until_ready((h, h_state, c_state))

    # Check vs. a precision-matched (bf16-matmul) reference...
    h_bf, c_bf = _reference_forward(x, h0, c0, W, b, matmul_dtype=jnp.bfloat16)
    assert jnp.allclose(h, h_bf, rtol=5e-2, atol=2e-3), "h mismatch (bf16 ref)"
    assert jnp.allclose(c_state, c_bf, rtol=5e-2, atol=2e-3), "c mismatch (bf16 ref)"

    # ...and vs. the full-f32 module semantics. NOTE: bf16 matmul, bf16
    # transcendentals (v6e/v7x) and the approx EUP reciprocal are explicit
    # precision choices, hence the relaxed tolerance.
    h_ref, c_ref = _reference_forward(x, h0, c0, W, b)
    assert jnp.allclose(h, h_ref, rtol=1e-1, atol=1e-2), "h mismatch (f32 ref)"
    assert jnp.allclose(c_state, c_ref, rtol=1e-1, atol=1e-2), "c mismatch (f32 ref)"

    print("KERNEL_OK")
</pallas_src>

<mosaic_0001>
module attributes {stable_mosaic.version = 11 : i64} {
  func.func @kernel(%arg0: i32, %arg1: memref<8x16xf32, #tpu.memory_space<vmem>>, %arg2: memref<8x32xf32, #tpu.memory_space<vmem>>, %arg3: memref<8x32xf32, #tpu.memory_space<vmem>>, %arg4: memref<16x128xbf16, #tpu.memory_space<vmem>>, %arg5: memref<32x128xbf16, #tpu.memory_space<vmem>>, %arg6: memref<1x128xf32, #tpu.memory_space<vmem>>, %arg7: memref<8x32xf32, #tpu.memory_space<vmem>>, %arg8: memref<8x32xf32, #tpu.memory_space<vmem>>) attributes {dimension_semantics = [#tpu.dimension_semantics<parallel>], iteration_bounds = array<i64: 2>, scalar_prefetch = 0 : i64, scratch_operands = 0 : i64, tpu.core_type = #tpu.core_type<tc>, window_params = [{transform_indices = @transform_0, window_bounds = array<i64: 8, 16>}, {transform_indices = @transform_1, window_bounds = array<i64: 8, 32>}, {transform_indices = @transform_2, window_bounds = array<i64: 8, 32>}, {pipeline_mode = #tpu.pipeline_mode<synchronous>, transform_indices = @transform_3, window_bounds = array<i64: 16, 128>}, {pipeline_mode = #tpu.pipeline_mode<synchronous>, transform_indices = @transform_4, window_bounds = array<i64: 32, 128>}, {pipeline_mode = #tpu.pipeline_mode<synchronous>, transform_indices = @transform_5, window_bounds = array<i64: 1, 128>}, {transform_indices = @transform_6, window_bounds = array<i64: 8, 32>}, {transform_indices = @transform_7, window_bounds = array<i64: 8, 32>}]} {
    %c0 = arith.constant 0 : index
    %c0_0 = arith.constant 0 : index
    %0 = vector.load %arg1[%c0, %c0_0] : memref<8x16xf32, #tpu.memory_space<vmem>>, vector<8x16xf32>
    %1 = arith.truncf %0 : vector<8x16xf32> to vector<8x16xbf16>
    %c0_1 = arith.constant 0 : index
    %c0_2 = arith.constant 0 : index
    %2 = vector.load %arg2[%c0_1, %c0_2] : memref<8x32xf32, #tpu.memory_space<vmem>>, vector<8x32xf32>
    %3 = arith.truncf %2 : vector<8x32xf32> to vector<8x32xbf16>
    %c0_3 = arith.constant 0 : index
    %c0_4 = arith.constant 0 : index
    %4 = vector.load %arg4[%c0_3, %c0_4] : memref<16x128xbf16, #tpu.memory_space<vmem>>, vector<16x128xbf16>
    %cst = arith.constant dense<0.000000e+00> : vector<8x128xf32>
    %5 = tpu.matmul %1, %4, %cst {dimension_numbers = #tpu.dot_dimension_numbers<[1], [0], [0], [1], [0, 0, 1, 1], [], []>} : vector<8x16xbf16>, vector<16x128xbf16>, vector<8x128xf32> -> vector<8x128xf32>
    %c0_5 = arith.constant 0 : index
    %c0_6 = arith.constant 0 : index
    %6 = vector.load %arg5[%c0_5, %c0_6] : memref<32x128xbf16, #tpu.memory_space<vmem>>, vector<32x128xbf16>
    %cst_7 = arith.constant dense<0.000000e+00> : vector<8x128xf32>
    %7 = tpu.matmul %3, %6, %cst_7 {dimension_numbers = #tpu.dot_dimension_numbers<[1], [0], [0], [1], [0, 0, 1, 1], [], []>} : vector<8x32xbf16>, vector<32x128xbf16>, vector<8x128xf32> -> vector<8x128xf32>
    %8 = arith.addf %5, %7 : vector<8x128xf32>
    %c0_8 = arith.constant 0 : index
    %c0_9 = arith.constant 0 : index
    %9 = vector.load %arg6[%c0_8, %c0_9] : memref<1x128xf32, #tpu.memory_space<vmem>>, vector<1x128xf32>
    %10 = vector.broadcast %9 : vector<1x128xf32> to vector<8x128xf32>
    %11 = arith.addf %8, %10 : vector<8x128xf32>
    %12 = vector.extract_strided_slice %11 {offsets = [0, 0], sizes = [8, 32], strides = [1, 1]} : vector<8x128xf32> to vector<8x32xf32>
    %cst_10 = arith.constant dense<0xFF800000> : vector<8xf32>
    %13 = vector.multi_reduction <maximumf>, %12, %cst_10 [1] : vector<8x32xf32> to vector<8xf32>
    %14 = vector.shape_cast %13 : vector<8xf32> to vector<8x1xf32>
    %15 = vector.broadcast %14 : vector<8x1xf32> to vector<8x32xf32>
    %16 = arith.subf %12, %15 : vector<8x32xf32>
    %17 = math.exp %16 : vector<8x32xf32>
    %cst_11 = arith.constant dense<0.000000e+00> : vector<8xf32>
    %18 = vector.multi_reduction <add>, %17, %cst_11 [1] : vector<8x32xf32> to vector<8xf32>
    %19 = vector.shape_cast %18 : vector<8xf32> to vector<8x1xf32>
    %20 = tpu.reciprocal %19 {approx = true} : vector<8x1xf32> -> vector<8x1xf32>
    %21 = vector.broadcast %20 : vector<8x1xf32> to vector<8x32xf32>
    %22 = arith.mulf %17, %21 : vector<8x32xf32>
    %23 = vector.extract_strided_slice %11 {offsets = [0, 32], sizes = [8, 32], strides = [1, 1]} : vector<8x128xf32> to vector<8x32xf32>
    %cst_12 = arith.constant dense<0xFF800000> : vector<8xf32>
    %24 = vector.multi_reduction <maximumf>, %23, %cst_12 [1] : vector<8x32xf32> to vector<8xf32>
    %25 = vector.shape_cast %24 : vector<8xf32> to vector<8x1xf32>
    %26 = vector.broadcast %25 : vector<8x1xf32> to vector<8x32xf32>
    %27 = arith.subf %23, %26 : vector<8x32xf32>
    %28 = math.exp %27 : vector<8x32xf32>
    %cst_13 = arith.constant dense<0.000000e+00> : vector<8xf32>
    %29 = vector.multi_reduction <add>, %28, %cst_13 [1] : vector<8x32xf32> to vector<8xf32>
    %30 = vector.shape_cast %29 : vector<8xf32> to vector<8x1xf32>
    %31 = tpu.reciprocal %30 {approx = true} : vector<8x1xf32> -> vector<8x1xf32>
    %32 = vector.broadcast %31 : vector<8x1xf32> to vector<8x32xf32>
    %33 = arith.mulf %28, %32 : vector<8x32xf32>
    %34 = vector.extract_strided_slice %11 {offsets = [0, 64], sizes = [8, 32], strides = [1, 1]} : vector<8x128xf32> to vector<8x32xf32>
    %35 = math.tanh %34 : vector<8x32xf32>
    %36 = vector.extract_strided_slice %11 {offsets = [0, 96], sizes = [8, 32], strides = [1, 1]} : vector<8x128xf32> to vector<8x32xf32>
    %cst_14 = arith.constant dense<0xFF800000> : vector<8xf32>
    %37 = vector.multi_reduction <maximumf>, %36, %cst_14 [1] : vector<8x32xf32> to vector<8xf32>
    %38 = vector.shape_cast %37 : vector<8xf32> to vector<8x1xf32>
    %39 = vector.broadcast %38 : vector<8x1xf32> to vector<8x32xf32>
    %40 = arith.subf %36, %39 : vector<8x32xf32>
    %41 = math.exp %40 : vector<8x32xf32>
    %cst_15 = arith.constant dense<0.000000e+00> : vector<8xf32>
    %42 = vector.multi_reduction <add>, %41, %cst_15 [1] : vector<8x32xf32> to vector<8xf32>
    %43 = vector.shape_cast %42 : vector<8xf32> to vector<8x1xf32>
    %44 = tpu.reciprocal %43 {approx = true} : vector<8x1xf32> -> vector<8x1xf32>
    %45 = vector.broadcast %44 : vector<8x1xf32> to vector<8x32xf32>
    %46 = arith.mulf %41, %45 : vector<8x32xf32>
    %c0_16 = arith.constant 0 : index
    %c0_17 = arith.constant 0 : index
    %47 = vector.load %arg3[%c0_16, %c0_17] : memref<8x32xf32, #tpu.memory_space<vmem>>, vector<8x32xf32>
    %48 = arith.mulf %47, %22 : vector<8x32xf32>
    %49 = arith.mulf %33, %35 : vector<8x32xf32>
    %50 = arith.addf %48, %49 : vector<8x32xf32>
    %51 = math.tanh %50 : vector<8x32xf32>
    %52 = arith.mulf %51, %46 : vector<8x32xf32>
    %c0_18 = arith.constant 0 : index
    %c0_19 = arith.constant 0 : index
    %53 = vector.load %arg7[%c0_18, %c0_19] : memref<8x32xf32, #tpu.memory_space<vmem>>, vector<8x32xf32>
    tpu.vector_store %arg7[%c0_18, %c0_19], %52 {strides = array<i32>} : memref<8x32xf32, #tpu.memory_space<vmem>>, vector<8x32xf32>,
    %c0_20 = arith.constant 0 : index
    %c0_21 = arith.constant 0 : index
    %54 = vector.load %arg8[%c0_20, %c0_21] : memref<8x32xf32, #tpu.memory_space<vmem>>, vector<8x32xf32>
    tpu.vector_store %arg8[%c0_20, %c0_21], %50 {strides = array<i32>} : memref<8x32xf32, #tpu.memory_space<vmem>>, vector<8x32xf32>,
    return
  }
  func.func @transform_0(%arg0: i32) -> (i32, i32) {
    %c0_i32 = arith.constant 0 : i32
    %c0_i32_0 = arith.constant 0 : i32
    return %arg0, %c0_i32 : i32, i32
  }
  func.func @transform_1(%arg0: i32) -> (i32, i32) {
    %c0_i32 = arith.constant 0 : i32
    %c0_i32_0 = arith.constant 0 : i32
    return %arg0, %c0_i32 : i32, i32
  }
  func.func @transform_2(%arg0: i32) -> (i32, i32) {
    %c0_i32 = arith.constant 0 : i32
    %c0_i32_0 = arith.constant 0 : i32
    return %arg0, %c0_i32 : i32, i32
  }
  func.func @transform_3(%arg0: i32) -> (i32, i32) {
    %c0_i32 = arith.constant 0 : i32
    %c0_i32_0 = arith.constant 0 : i32
    %c0_i32_1 = arith.constant 0 : i32
    return %c0_i32, %c0_i32_0 : i32, i32
  }
  func.func @transform_4(%arg0: i32) -> (i32, i32) {
    %c0_i32 = arith.constant 0 : i32
    %c0_i32_0 = arith.constant 0 : i32
    %c0_i32_1 = arith.constant 0 : i32
    return %c0_i32, %c0_i32_0 : i32, i32
  }
  func.func @transform_5(%arg0: i32) -> (i32, i32) {
    %c0_i32 = arith.constant 0 : i32
    %c0_i32_0 = arith.constant 0 : i32
    %c0_i32_1 = arith.constant 0 : i32
    return %c0_i32, %c0_i32_0 : i32, i32
  }
  func.func @transform_6(%arg0: i32) -> (i32, i32) {
    %c0_i32 = arith.constant 0 : i32
    %c0_i32_0 = arith.constant 0 : i32
    return %arg0, %c0_i32 : i32, i32
  }
  func.func @transform_7(%arg0: i32) -> (i32, i32) {
    %c0_i32 = arith.constant 0 : i32
    %c0_i32_0 = arith.constant 0 : i32
    return %arg0, %c0_i32 : i32, i32
  }
}

module attributes {stable_mosaic.version = 11 : i64} {
  func.func @kernel(%arg0: i32, %arg1: memref<8x16xf32, #tpu.memory_space<vmem>>, %arg2: memref<8x32xf32, #tpu.memory_space<vmem>>, %arg3: memref<8x32xf32, #tpu.memory_space<vmem>>, %arg4: memref<16x128xbf16, #tpu.memory_space<vmem>>, %arg5: memref<32x128xbf16, #tpu.memory_space<vmem>>, %arg6: memref<1x128xf32, #tpu.memory_space<vmem>>, %arg7: memref<8x32xf32, #tpu.memory_space<vmem>>, %arg8: memref<8x32xf32, #tpu.memory_space<vmem>>) attributes {dimension_semantics = [#tpu.dimension_semantics<parallel>], iteration_bounds = array<i64: 2>, scalar_prefetch = 0 : i64, scratch_operands = 0 : i64, tpu.core_type = #tpu.core_type<tc>, window_params = [{transform_indices = @transform_0, window_bounds = array<i64: 8, 16>}, {transform_indices = @transform_1, window_bounds = array<i64: 8, 32>}, {transform_indices = @transform_2, window_bounds = array<i64: 8, 32>}, {pipeline_mode = #tpu.pipeline_mode<synchronous>, transform_indices = @transform_3, window_bounds = array<i64: 16, 128>}, {pipeline_mode = #tpu.pipeline_mode<synchronous>, transform_indices = @transform_4, window_bounds = array<i64: 32, 128>}, {pipeline_mode = #tpu.pipeline_mode<synchronous>, transform_indices = @transform_5, window_bounds = array<i64: 1, 128>}, {transform_indices = @transform_6, window_bounds = array<i64: 8, 32>}, {transform_indices = @transform_7, window_bounds = array<i64: 8, 32>}]} {
    %c0 = arith.constant 0 : index
    %c0_0 = arith.constant 0 : index
    %0 = vector.load %arg1[%c0, %c0_0] : memref<8x16xf32, #tpu.memory_space<vmem>>, vector<8x16xf32>
    %1 = arith.truncf %0 : vector<8x16xf32> to vector<8x16xbf16>
    %c0_1 = arith.constant 0 : index
    %c0_2 = arith.constant 0 : index
    %2 = vector.load %arg2[%c0_1, %c0_2] : memref<8x32xf32, #tpu.memory_space<vmem>>, vector<8x32xf32>
    %3 = arith.truncf %2 : vector<8x32xf32> to vector<8x32xbf16>
    %c0_3 = arith.constant 0 : index
    %c0_4 = arith.constant 0 : index
    %4 = vector.load %arg4[%c0_3, %c0_4] : memref<16x128xbf16, #tpu.memory_space<vmem>>, vector<16x128xbf16>
    %cst = arith.constant dense<0.000000e+00> : vector<8x128xf32>
    %5 = tpu.matmul %1, %4, %cst {dimension_numbers = #tpu.dot_dimension_numbers<[1], [0], [0], [1], [0, 0, 1, 1], [], []>} : vector<8x16xbf16>, vector<16x128xbf16>, vector<8x128xf32> -> vector<8x128xf32>
    %c0_5 = arith.constant 0 : index
    %c0_6 = arith.constant 0 : index
    %6 = vector.load %arg5[%c0_5, %c0_6] : memref<32x128xbf16, #tpu.memory_space<vmem>>, vector<32x128xbf16>
    %cst_7 = arith.constant dense<0.000000e+00> : vector<8x128xf32>
    %7 = tpu.matmul %3, %6, %cst_7 {dimension_numbers = #tpu.dot_dimension_numbers<[1], [0], [0], [1], [0, 0, 1, 1], [], []>} : vector<8x32xbf16>, vector<32x128xbf16>, vector<8x128xf32> -> vector<8x128xf32>
    %8 = arith.addf %5, %7 : vector<8x128xf32>
    %c0_8 = arith.constant 0 : index
    %c0_9 = arith.constant 0 : index
    %9 = vector.load %arg6[%c0_8, %c0_9] : memref<1x128xf32, #tpu.memory_space<vmem>>, vector<1x128xf32>
    %10 = vector.broadcast %9 : vector<1x128xf32> to vector<8x128xf32>
    %11 = arith.addf %8, %10 : vector<8x128xf32>
    %12 = vector.extract_strided_slice %11 {offsets = [0, 0], sizes = [8, 32], strides = [1, 1]} : vector<8x128xf32> to vector<8x32xf32>
    %cst_10 = arith.constant dense<0xFF800000> : vector<8xf32>
    %13 = vector.multi_reduction <maximumf>, %12, %cst_10 [1] : vector<8x32xf32> to vector<8xf32>
    %14 = vector.shape_cast %13 : vector<8xf32> to vector<8x1xf32>
    %15 = vector.broadcast %14 : vector<8x1xf32> to vector<8x32xf32>
    %16 = arith.subf %12, %15 : vector<8x32xf32>
    %17 = math.exp %16 : vector<8x32xf32>
    %cst_11 = arith.constant dense<0.000000e+00> : vector<8xf32>
    %18 = vector.multi_reduction <add>, %17, %cst_11 [1] : vector<8x32xf32> to vector<8xf32>
    %19 = vector.shape_cast %18 : vector<8xf32> to vector<8x1xf32>
    %20 = tpu.reciprocal %19 {approx = true} : vector<8x1xf32> -> vector<8x1xf32>
    %21 = vector.broadcast %20 : vector<8x1xf32> to vector<8x32xf32>
    %22 = arith.mulf %17, %21 : vector<8x32xf32>
    %23 = vector.extract_strided_slice %11 {offsets = [0, 32], sizes = [8, 32], strides = [1, 1]} : vector<8x128xf32> to vector<8x32xf32>
    %cst_12 = arith.constant dense<0xFF800000> : vector<8xf32>
    %24 = vector.multi_reduction <maximumf>, %23, %cst_12 [1] : vector<8x32xf32> to vector<8xf32>
    %25 = vector.shape_cast %24 : vector<8xf32> to vector<8x1xf32>
    %26 = vector.broadcast %25 : vector<8x1xf32> to vector<8x32xf32>
    %27 = arith.subf %23, %26 : vector<8x32xf32>
    %28 = math.exp %27 : vector<8x32xf32>
    %cst_13 = arith.constant dense<0.000000e+00> : vector<8xf32>
    %29 = vector.multi_reduction <add>, %28, %cst_13 [1] : vector<8x32xf32> to vector<8xf32>
    %30 = vector.shape_cast %29 : vector<8xf32> to vector<8x1xf32>
    %31 = tpu.reciprocal %30 {approx = true} : vector<8x1xf32> -> vector<8x1xf32>
    %32 = vector.broadcast %31 : vector<8x1xf32> to vector<8x32xf32>
    %33 = arith.mulf %28, %32 : vector<8x32xf32>
    %34 = vector.extract_strided_slice %11 {offsets = [0, 64], sizes = [8, 32], strides = [1, 1]} : vector<8x128xf32> to vector<8x32xf32>
    %35 = math.tanh %34 : vector<8x32xf32>
    %36 = vector.extract_strided_slice %11 {offsets = [0, 96], sizes = [8, 32], strides = [1, 1]} : vector<8x128xf32> to vector<8x32xf32>
    %cst_14 = arith.constant dense<0xFF800000> : vector<8xf32>
    %37 = vector.multi_reduction <maximumf>, %36, %cst_14 [1] : vector<8x32xf32> to vector<8xf32>
    %38 = vector.shape_cast %37 : vector<8xf32> to vector<8x1xf32>
    %39 = vector.broadcast %38 : vector<8x1xf32> to vector<8x32xf32>
    %40 = arith.subf %36, %39 : vector<8x32xf32>
    %41 = math.exp %40 : vector<8x32xf32>
    %cst_15 = arith.constant dense<0.000000e+00> : vector<8xf32>
    %42 = vector.multi_reduction <add>, %41, %cst_15 [1] : vector<8x32xf32> to vector<8xf32>
    %43 = vector.shape_cast %42 : vector<8xf32> to vector<8x1xf32>
    %44 = tpu.reciprocal %43 {approx = true} : vector<8x1xf32> -> vector<8x1xf32>
    %45 = vector.broadcast %44 : vector<8x1xf32> to vector<8x32xf32>
    %46 = arith.mulf %41, %45 : vector<8x32xf32>
    %c0_16 = arith.constant 0 : index
    %c0_17 = arith.constant 0 : index
    %47 = vector.load %arg3[%c0_16, %c0_17] : memref<8x32xf32, #tpu.memory_space<vmem>>, vector<8x32xf32>
    %48 = arith.mulf %47, %22 : vector<8x32xf32>
    %49 = arith.mulf %33, %35 : vector<8x32xf32>
    %50 = arith.addf %48, %49 : vector<8x32xf32>
    %51 = math.tanh %50 : vector<8x32xf32>
    %52 = arith.mulf %51, %46 : vector<8x32xf32>
    %c0_18 = arith.constant 0 : index
    %c0_19 = arith.constant 0 : index
    %53 = vector.load %arg7[%c0_18, %c0_19] : memref<8x32xf32, #tpu.memory_space<vmem>>, vector<8x32xf32>
    tpu.vector_store %arg7[%c0_18, %c0_19], %52 {strides = array<i32>} : memref<8x32xf32, #tpu.memory_space<vmem>>, vector<8x32xf32>,
    %c0_20 = arith.constant 0 : index
    %c0_21 = arith.constant 0 : index
    %54 = vector.load %arg8[%c0_20, %c0_21] : memref<8x32xf32, #tpu.memory_space<vmem>>, vector<8x32xf32>
    tpu.vector_store %arg8[%c0_20, %c0_21], %50 {strides = array<i32>} : memref<8x32xf32, #tpu.memory_space<vmem>>, vector<8x32xf32>,
    return
  }
  func.func @transform_0(%arg0: i32) -> (i32, i32) {
    %c0_i32 = arith.constant 0 : i32
    %c0_i32_0 = arith.constant 0 : i32
    return %arg0, %c0_i32 : i32, i32
  }
  func.func @transform_1(%arg0: i32) -> (i32, i32) {
    %c0_i32 = arith.constant 0 : i32
    %c0_i32_0 = arith.constant 0 : i32
    return %arg0, %c0_i32 : i32, i32
  }
  func.func @transform_2(%arg0: i32) -> (i32, i32) {
    %c0_i32 = arith.constant 0 : i32
    %c0_i32_0 = arith.constant 0 : i32
    return %arg0, %c0_i32 : i32, i32
  }
  func.func @transform_3(%arg0: i32) -> (i32, i32) {
    %c0_i32 = arith.constant 0 : i32
    %c0_i32_0 = arith.constant 0 : i32
    %c0_i32_1 = arith.constant 0 : i32
    return %c0_i32, %c0_i32_0 : i32, i32
  }
  func.func @transform_4(%arg0: i32) -> (i32, i32) {
    %c0_i32 = arith.constant 0 : i32
    %c0_i32_0 = arith.constant 0 : i32
    %c0_i32_1 = arith.constant 0 : i32
    return %c0_i32, %c0_i32_0 : i32, i32
  }
  func.func @transform_5(%arg0: i32) -> (i32, i32) {
    %c0_i32 = arith.constant 0 : i32
    %c0_i32_0 = arith.constant 0 : i32
    %c0_i32_1 = arith.constant 0 : i32
    return %c0_i32, %c0_i32_0 : i32, i32
  }
  func.func @transform_6(%arg0: i32) -> (i32, i32) {
    %c0_i32 = arith.constant 0 : i32
    %c0_i32_0 = arith.constant 0 : i32
    return %arg0, %c0_i32 : i32, i32
  }
  func.func @transform_7(%arg0: i32) -> (i32, i32) {
    %c0_i32 = arith.constant 0 : i32
    %c0_i32_0 = arith.constant 0 : i32
    return %arg0, %c0_i32 : i32, i32
  }
}

</mosaic_0001>

<llo_original>
// kernel: tpu_custom_call.1
$region0: #{tpu_custom_call.1}
  #allocation0 [shape = 'u32[]', space=smem, size = 0x4, offset = 0x4, fixed_abs, tag = 'smem constant byte address 0x4 - core index']
  #allocation1 [shape = 'u32[144,128]{1,0:T(1,128)}', space=vmem, size = 0x12000, scoped, tag = 'internal scratch']
  %s0 = inlined_call_operand.hbm [shape: f32[16,16], index: 0, kind: input, shape index: {}]
  %s1 = inlined_call_operand.hbm [shape: f32[16,32], index: 1, kind: input, shape index: {}]
  %s2 = inlined_call_operand.hbm [shape: f32[16,32], index: 2, kind: input, shape index: {}]
  %s3 = inlined_call_operand.vmem [shape: bf16[16,128], index: 3, kind: input, shape index: {}]
  %s4 = inlined_call_operand.hbm [shape: bf16[32,128], index: 4, kind: input, shape index: {}]
  %s5 = inlined_call_operand.vmem [shape: f32[1,128], index: 5, kind: input, shape index: {}]
  %s6 = inlined_call_operand.hbm [shape: f32[16,32], index: 6, kind: output, shape index: {0}]
  %s7 = inlined_call_operand.hbm [shape: f32[16,32], index: 7, kind: output, shape index: {1}]
  %8 = xla_tuple %s6, %s7
  %s9 = sld [smem:[#allocation0]]
  $region81: #{tpu_custom_call.1} parent=0
    _
  %s11 = ssub.s32 1, %s9
  %s12 = scalar_select 0, %s11, %s9
  $region1: #{tpu_custom_call.1} parent=0
    #allocation2 [shape = 'u8[8192]{0}', space=vmem, size = 0x2000, scoped, tag = 'input window, operand 0']
    #allocation3 [shape = 's32[2]{0}', space=sflag, size = 0x8, scoped, tag = 'scoped memory for tpu_custom_call.1']
    #allocation4 [shape = 's32[2]{0}', space=sflag, size = 0x8, scoped, tag = 'scoped memory for tpu_custom_call.1']
    #allocation5 [shape = 'u8[8192]{0}', space=vmem, size = 0x2000, scoped, tag = 'input window, operand 1']
    #allocation6 [shape = 's32[2]{0}', space=sflag, size = 0x8, scoped, tag = 'scoped memory for tpu_custom_call.1']
    #allocation7 [shape = 'u8[8192]{0}', space=vmem, size = 0x2000, scoped, tag = 'input window, operand 2']
    #allocation8 [shape = 'u8[8192]{0}', space=vmem, size = 0x2000, scoped, tag = 'input window, operand 4, single buffered']
    #allocation9 [shape = 's32[1]{0}', space=sflag, size = 0x4, scoped, tag = 'scoped memory for tpu_custom_call.1']
    #allocation10 [shape = 'u8[8192]{0}', space=vmem, size = 0x2000, scoped, tag = 'output window, operand 0']
    #allocation11 [shape = 'u8[8192]{0}', space=vmem, size = 0x2000, scoped, tag = 'output window, operand 1']
    #allocation12 [shape = 's32[2]{0}', space=sflag, size = 0x8, scoped, tag = 'scoped memory for tpu_custom_call.1']
    %13 = vsyncpa [#allocation3], 0
    %s14 = scalar_lea.sflag [#allocation3], 1
    %15 = vsyncpa %s14, 0
    %16 = vsyncpa [#allocation6], 0
    %s17 = scalar_lea.sflag [#allocation6], 1
    %18 = vsyncpa %s17, 0
    %19 = vsyncpa [#allocation9], 0
    %20 = vsyncpa [#allocation4], 0
    %s21 = scalar_lea.sflag [#allocation4], 1
    %22 = vsyncpa %s21, 0
    %23 = vsyncpa [#allocation12], 0
    %s24 = scalar_lea.sflag [#allocation12], 1
    %25 = vsyncpa %s24, 0
    loop: start=0, step=1, limit=4
    $region2: #{tpu_custom_call.1} parent=1 // loop_pre_header
      _
    $region3: #{tpu_custom_call.1} parent=1 // loop_header
      %s27 = sphi 0, %s31
      %p28 = scmp.ge.s32.totalorder %s27, 4
      %s37 = sphi 0, %s39
      %s40 = sphi 0, %s37
      %s41 = sphi 0, %s40
      %s57 = sphi 0, %s41
      %s63 = sphi 0, %s65
      %s66 = sphi 0, %s63
      %s67 = sphi 0, %s66
      %s83 = sphi 0, %s67
      %s89 = sphi 0, %s91
      %s92 = sphi 0, %s89
      %s93 = sphi 0, %s92
      %s109 = sphi 0, %s93
      %s113 = sphi 0, %s113
      %s115 = sphi 0, %s113
      %s116 = sphi 0, %s115
      %s130 = sphi 0, %s116
      %s134 = sphi 0, %s134
      %s136 = sphi 0, %s134
      %s137 = sphi 0, %s136
      %s151 = sphi 0, %s137
      %s155 = sphi 0, %s155
      %s157 = sphi 0, %s155
      %s158 = sphi 0, %s157
      %s172 = sphi 0, %s158
      %s178 = sphi 0, %s180
      %s181 = sphi 0, %s178
      %s182 = sphi 0, %s181
      %s198 = sphi 0, %s182
      %s204 = sphi 0, %s206
      %s207 = sphi 0, %s204
      %s208 = sphi 0, %s207
      %s224 = sphi 0, %s208
    $region4: #{tpu_custom_call.1} parent=1 // loop_header_branch
      %30 = sbr.rel (%p28) target = $region8
    $region5: #{tpu_custom_call.1} parent=1 // loop_body
      %s32 = ssub.s32 %s27, 1
      %s33 = ssub.s32 %s27, 2
      %s34 = sadd.s32 %s27, 1
      %s35 = ssub.s32 %s27, %s34
      %p36 = scmp.eq.s32.totalorder %s35, 0
      %s38 = sadd.s32 %s37, 1
      %s39 = scalar_select %p36, %s37, %s38
      %p42 = pneg %p36
      %p43 = scmp.eq.s32.totalorder %s27, 1
      %p44 = por %p42, %p43
      %p45 = scmp.ne.s32.totalorder %s37, %s40
      %p46 = scmp.eq.s32.totalorder %s27, 0
      %p47 = por %p45, %p46
      %p48 = scmp.ne.s32.totalorder %s37, %s40
      %p49 = scmp.eq.s32.totalorder %s32, 1
      %p50 = por %p48, %p49
      %p51 = scmp.ne.s32.totalorder %s40, %s41
      %p52 = scmp.eq.s32.totalorder %s32, 0
      %p53 = por %p51, %p52
      %p54 = scmp.ne.s32.totalorder %s40, %s41
      %p55 = scmp.eq.s32.totalorder %s33, 1
      %p56 = por %p54, %p55
      %p58 = scmp.ne.s32.totalorder %s41, %s57
      %p59 = scmp.eq.s32.totalorder %s33, 0
      %p60 = por %p58, %p59
      %s61 = ssub.s32 %s27, %s34
      %p62 = scmp.eq.s32.totalorder %s61, 0
      %s64 = sadd.s32 %s63, 1
      %s65 = scalar_select %p62, %s63, %s64
      %p68 = pneg %p62
      %p69 = scmp.eq.s32.totalorder %s27, 1
      %p70 = por %p68, %p69
      %p71 = scmp.ne.s32.totalorder %s63, %s66
      %p72 = scmp.eq.s32.totalorder %s27, 0
      %p73 = por %p71, %p72
      %p74 = scmp.ne.s32.totalorder %s63, %s66
      %p75 = scmp.eq.s32.totalorder %s32, 1
      %p76 = por %p74, %p75
      %p77 = scmp.ne.s32.totalorder %s66, %s67
      %p78 = scmp.eq.s32.totalorder %s32, 0
      %p79 = por %p77, %p78
      %p80 = scmp.ne.s32.totalorder %s66, %s67
      %p81 = scmp.eq.s32.totalorder %s33, 1
      %p82 = por %p80, %p81
      %p84 = scmp.ne.s32.totalorder %s67, %s83
      %p85 = scmp.eq.s32.totalorder %s33, 0
      %p86 = por %p84, %p85
      %s87 = ssub.s32 %s27, %s34
      %p88 = scmp.eq.s32.totalorder %s87, 0
      %s90 = sadd.s32 %s89, 1
      %s91 = scalar_select %p88, %s89, %s90
      %p94 = pneg %p88
      %p95 = scmp.eq.s32.totalorder %s27, 1
      %p96 = por %p94, %p95
      %p97 = scmp.ne.s32.totalorder %s89, %s92
      %p98 = scmp.eq.s32.totalorder %s27, 0
      %p99 = por %p97, %p98
      %p100 = scmp.ne.s32.totalorder %s89, %s92
      %p101 = scmp.eq.s32.totalorder %s32, 1
      %p102 = por %p100, %p101
      %p103 = scmp.ne.s32.totalorder %s92, %s93
      %p104 = scmp.eq.s32.totalorder %s32, 0
      %p105 = por %p103, %p104
      %p106 = scmp.ne.s32.totalorder %s92, %s93
      %p107 = scmp.eq.s32.totalorder %s33, 1
      %p108 = por %p106, %p107
      %p110 = scmp.ne.s32.totalorder %s93, %s109
      %p111 = scmp.eq.s32.totalorder %s33, 0
      %p112 = por %p110, %p111
      %s114 = sadd.s32 %s113, 1
      %p117 = scmp.eq.s32.totalorder %s27, 1
      %p118 = scmp.ne.s32.totalorder %s113, %s115
      %p119 = scmp.eq.s32.totalorder %s27, 0
      %p120 = por %p118, %p119
      %p121 = scmp.ne.s32.totalorder %s113, %s115
      %p122 = scmp.eq.s32.totalorder %s32, 1
      %p123 = por %p121, %p122
      %p124 = scmp.ne.s32.totalorder %s115, %s116
      %p125 = scmp.eq.s32.totalorder %s32, 0
      %p126 = por %p124, %p125
      %p127 = scmp.ne.s32.totalorder %s115, %s116
      %p128 = scmp.eq.s32.totalorder %s33, 1
      %p129 = por %p127, %p128
      %p131 = scmp.ne.s32.totalorder %s116, %s130
      %p132 = scmp.eq.s32.totalorder %s33, 0
      %p133 = por %p131, %p132
      %s135 = sadd.s32 %s134, 1
      %p138 = scmp.eq.s32.totalorder %s27, 1
      %p139 = scmp.ne.s32.totalorder %s134, %s136
      %p140 = scmp.eq.s32.totalorder %s27, 0
      %p141 = por %p139, %p140
      %p142 = scmp.ne.s32.totalorder %s134, %s136
      %p143 = scmp.eq.s32.totalorder %s32, 1
      %p144 = por %p142, %p143
      %p145 = scmp.ne.s32.totalorder %s136, %s137
      %p146 = scmp.eq.s32.totalorder %s32, 0
      %p147 = por %p145, %p146
      %p148 = scmp.ne.s32.totalorder %s136, %s137
      %p149 = scmp.eq.s32.totalorder %s33, 1
      %p150 = por %p148, %p149
      %p152 = scmp.ne.s32.totalorder %s137, %s151
      %p153 = scmp.eq.s32.totalorder %s33, 0
      %p154 = por %p152, %p153
      %s156 = sadd.s32 %s155, 1
      %p159 = scmp.eq.s32.totalorder %s27, 1
      %p160 = scmp.ne.s32.totalorder %s155, %s157
      %p161 = scmp.eq.s32.totalorder %s27, 0
      %p162 = por %p160, %p161
      %p163 = scmp.ne.s32.totalorder %s155, %s157
      %p164 = scmp.eq.s32.totalorder %s32, 1
      %p165 = por %p163, %p164
      %p166 = scmp.ne.s32.totalorder %s157, %s158
      %p167 = scmp.eq.s32.totalorder %s32, 0
      %p168 = por %p166, %p167
      %p169 = scmp.ne.s32.totalorder %s157, %s158
      %p170 = scmp.eq.s32.totalorder %s33, 1
      %p171 = por %p169, %p170
      %p173 = scmp.ne.s32.totalorder %s158, %s172
      %p174 = scmp.eq.s32.totalorder %s33, 0
      %p175 = por %p173, %p174
      %s176 = ssub.s32 %s27, %s34
      %p177 = scmp.eq.s32.totalorder %s176, 0
      %s179 = sadd.s32 %s178, 1
      %s180 = scalar_select %p177, %s178, %s179
      %p183 = pneg %p177
      %p184 = scmp.eq.s32.totalorder %s27, 1
      %p185 = por %p183, %p184
      %p186 = scmp.ne.s32.totalorder %s178, %s181
      %p187 = scmp.eq.s32.totalorder %s27, 0
      %p188 = por %p186, %p187
      %p189 = scmp.ne.s32.totalorder %s178, %s181
      %p190 = scmp.eq.s32.totalorder %s32, 1
      %p191 = por %p189, %p190
      %p192 = scmp.ne.s32.totalorder %s181, %s182
      %p193 = scmp.eq.s32.totalorder %s32, 0
      %p194 = por %p192, %p193
      %p195 = scmp.ne.s32.totalorder %s181, %s182
      %p196 = scmp.eq.s32.totalorder %s33, 1
      %p197 = por %p195, %p196
      %p199 = scmp.ne.s32.totalorder %s182, %s198
      %p200 = scmp.eq.s32.totalorder %s33, 0
      %p201 = por %p199, %p200
      %s202 = ssub.s32 %s27, %s34
      %p203 = scmp.eq.s32.totalorder %s202, 0
      %s205 = sadd.s32 %s204, 1
      %s206 = scalar_select %p203, %s204, %s205
      %p209 = pneg %p203
      %p210 = scmp.eq.s32.totalorder %s27, 1
      %p211 = por %p209, %p210
      %p212 = scmp.ne.s32.totalorder %s204, %s207
      %p213 = scmp.eq.s32.totalorder %s27, 0
      %p214 = por %p212, %p213
      %p215 = scmp.ne.s32.totalorder %s204, %s207
      %p216 = scmp.eq.s32.totalorder %s32, 1
      %p217 = por %p215, %p216
      %p218 = scmp.ne.s32.totalorder %s207, %s208
      %p219 = scmp.eq.s32.totalorder %s32, 0
      %p220 = por %p218, %p219
      %p221 = scmp.ne.s32.totalorder %s207, %s208
      %p222 = scmp.eq.s32.totalorder %s33, 1
      %p223 = por %p221, %p222
      %p225 = scmp.ne.s32.totalorder %s208, %s224
      %p226 = scmp.eq.s32.totalorder %s33, 0
      %p227 = por %p225, %p226
      %p228 = scmp.le.s32.totalorder 1, %s27
      %p229 = scmp.lt.s32.totalorder %s27, 3
      %p230 = pnand %p228, %p229
      %p231 = pneg %p230
      // Predicated region
      $region9: #{tpu_custom_call.1} parent=5 // pred_check
        _
      $region10: #{tpu_custom_call.1} parent=5 // pred_check_branch
        %233 = sbr.rel (%p230) target = $region12
      $region11: #{tpu_custom_call.1} parent=5 // pred_region
        %s234 = ssub.s32 %s27, 1
        // Predicated region
        $region13: #{tpu_custom_call.1} parent=11 // pred_check
          %p235 = pneg %p126
        $region14: #{tpu_custom_call.1} parent=11 // pred_check_branch
          %237 = sbr.rel (%p235) target = $region16
        $region15: #{tpu_custom_call.1} parent=11 // pred_region
          _
        $region16: #{tpu_custom_call.1} parent=11 // pred_fallthru
          _
        // Predicated region
        $region17: #{tpu_custom_call.1} parent=11 // pred_check
          %p238 = pneg %p147
        $region18: #{tpu_custom_call.1} parent=11 // pred_check_branch
          %240 = sbr.rel (%p238) target = $region20
        $region19: #{tpu_custom_call.1} parent=11 // pred_region
          %s242 = ssub.s32 256, 256
          %243 = vsyncadd [#allocation9], %s242
          %s244 = sshll.u32 [#allocation8], 4
          %s245 = int_to_ptr.vmem [resolvable:$true] %s244
          %250 = dma.hbm_to_vmem [thread:$0]  %s4, 256, %s245, [#allocation9], 64, 64, 4
        $region20: #{tpu_custom_call.1} parent=11 // pred_fallthru
          _
        // Predicated region
        $region21: #{tpu_custom_call.1} parent=11 // pred_check
          %p251 = pneg %p168
        $region22: #{tpu_custom_call.1} parent=11 // pred_check_branch
          %253 = sbr.rel (%p251) target = $region24
        $region23: #{tpu_custom_call.1} parent=11 // pred_region
          _
        $region24: #{tpu_custom_call.1} parent=11 // pred_fallthru
          _
      $region12: #{tpu_custom_call.1} parent=5 // pred_fallthru
        _
      %p254 = scmp.lt.s32.totalorder %s27, 2
      // Predicated region
      $region25: #{tpu_custom_call.1} parent=5 // pred_check
        %p255 = pneg %p254
      $region26: #{tpu_custom_call.1} parent=5 // pred_check_branch
        %257 = sbr.rel (%p255) target = $region28
      $region27: #{tpu_custom_call.1} parent=5 // pred_region
        // Predicated region
        $region29: #{tpu_custom_call.1} parent=27 // pred_check
          %p258 = pneg %p47
        $region30: #{tpu_custom_call.1} parent=27 // pred_check_branch
          %260 = sbr.rel (%p258) target = $region32
        $region31: #{tpu_custom_call.1} parent=27 // pred_region
          %s261 = sand.u32 %s37, 1
          %s262 = scalar_lea.sflag [#allocation3], %s261
          %s263 = sand.u32 %s37, 1
          %s264 = smul.addr %s263, 8
          %s265 = scalar_lea.vmem [#allocation2], %s264
          %s267 = ssub.s32 128, 128
          %268 = vsyncadd %s262, %s267
          %s269 = smul.addr %s27, 128
          %s270 = scalar_lea.hbm %s0, %s269
          %s272 = sshll.u32 %s265, 4
          %s273 = int_to_ptr.vmem [resolvable:$true] %s272
          %275 = dma.hbm_to_vmem [thread:$0]  %s270, 128, %s273, %s262
        $region32: #{tpu_custom_call.1} parent=27 // pred_fallthru
          _
        // Predicated region
        $region33: #{tpu_custom_call.1} parent=27 // pred_check
          %p276 = pneg %p73
        $region34: #{tpu_custom_call.1} parent=27 // pred_check_branch
          %278 = sbr.rel (%p276) target = $region36
        $region35: #{tpu_custom_call.1} parent=27 // pred_region
          %s279 = sand.u32 %s27, 1
          %s280 = scalar_lea.sflag [#allocation6], %s279
          %s281 = sand.u32 %s63, 1
          %s282 = smul.addr %s281, 8
          %s283 = scalar_lea.vmem [#allocation5], %s282
          %s285 = ssub.s32 128, 128
          %286 = vsyncadd %s280, %s285
          %s287 = smul.addr %s27, 128
          %s288 = scalar_lea.hbm %s1, %s287
          %s290 = sshll.u32 %s283, 4
          %s291 = int_to_ptr.vmem [resolvable:$true] %s290
          %293 = dma.hbm_to_vmem [thread:$0]  %s288, 128, %s291, %s280
        $region36: #{tpu_custom_call.1} parent=27 // pred_fallthru
          _
        // Predicated region
        $region37: #{tpu_custom_call.1} parent=27 // pred_check
          %p294 = pneg %p99
        $region38: #{tpu_custom_call.1} parent=27 // pred_check_branch
          %296 = sbr.rel (%p294) target = $region40
        $region39: #{tpu_custom_call.1} parent=27 // pred_region
          %s297 = sand.u32 %s27, 1
          %s298 = scalar_lea.sflag [#allocation6], %s297
          %s299 = sand.u32 %s89, 1
          %s300 = smul.addr %s299, 8
          %s301 = scalar_lea.vmem [#allocation7], %s300
          %s303 = ssub.s32 128, 128
          %304 = vsyncadd %s298, %s303
          %s305 = smul.addr %s27, 128
          %s306 = scalar_lea.hbm %s2, %s305
          %s308 = sshll.u32 %s301, 4
          %s309 = int_to_ptr.vmem [resolvable:$true] %s308
          %311 = dma.hbm_to_vmem [thread:$0]  %s306, 128, %s309, %s298
        $region40: #{tpu_custom_call.1} parent=27 // pred_fallthru
          _
      $region28: #{tpu_custom_call.1} parent=5 // pred_fallthru
        _
      %p312 = scmp.le.s32.totalorder 1, %s27
      %p313 = scmp.lt.s32.totalorder %s27, 3
      %p314 = pnand %p312, %p313
      %p315 = pneg %p314
      // Predicated region
      $region41: #{tpu_custom_call.1} parent=5 // pred_check
        _
      $region42: #{tpu_custom_call.1} parent=5 // pred_check_branch
        %317 = sbr.rel (%p314) target = $region44
      $region43: #{tpu_custom_call.1} parent=5 // pred_region
        %s318 = ssub.s32 %s27, 1
        %s319 = sand.u32 %s40, 1
        %s320 = scalar_lea.sflag [#allocation3], %s319
        %s321 = sand.u32 %s40, 1
        %s322 = smul.addr %s321, 8
        %s323 = scalar_lea.vmem [#allocation2], %s322
        // Predicated region
        $region45: #{tpu_custom_call.1} parent=43 // pred_check
          %p324 = pneg %p53
        $region46: #{tpu_custom_call.1} parent=43 // pred_check_branch
          %326 = sbr.rel (%p324) target = $region48
        $region47: #{tpu_custom_call.1} parent=43 // pred_region
          %327 = dma.done %s320, 128
        $region48: #{tpu_custom_call.1} parent=43 // pred_fallthru
          _
        %s328 = sand.u32 %s32, 1
        %s329 = scalar_lea.sflag [#allocation6], %s328
        %s330 = sand.u32 %s66, 1
        %s331 = smul.addr %s330, 8
        %s332 = scalar_lea.vmem [#allocation5], %s331
        // Predicated region
        $region49: #{tpu_custom_call.1} parent=43 // pred_check
          %p333 = pneg %p79
        $region50: #{tpu_custom_call.1} parent=43 // pred_check_branch
          %335 = sbr.rel (%p333) target = $region52
        $region51: #{tpu_custom_call.1} parent=43 // pred_region
          %336 = dma.done %s329, 128
        $region52: #{tpu_custom_call.1} parent=43 // pred_fallthru
          _
        %s337 = sand.u32 %s32, 1
        %s338 = scalar_lea.sflag [#allocation6], %s337
        %s339 = sand.u32 %s92, 1
        %s340 = smul.addr %s339, 8
        %s341 = scalar_lea.vmem [#allocation7], %s340
        // Predicated region
        $region53: #{tpu_custom_call.1} parent=43 // pred_check
          %p342 = pneg %p105
        $region54: #{tpu_custom_call.1} parent=43 // pred_check_branch
          %344 = sbr.rel (%p342) target = $region56
        $region55: #{tpu_custom_call.1} parent=43 // pred_region
          %345 = dma.done %s338, 128
        $region56: #{tpu_custom_call.1} parent=43 // pred_fallthru
          _
        // Predicated region
        $region57: #{tpu_custom_call.1} parent=43 // pred_check
          %p346 = pneg %p147
        $region58: #{tpu_custom_call.1} parent=43 // pred_check_branch
          %348 = sbr.rel (%p346) target = $region60
        $region59: #{tpu_custom_call.1} parent=43 // pred_region
          %349 = dma.done [#allocation9], 256
        $region60: #{tpu_custom_call.1} parent=43 // pred_fallthru
          _
        %s350 = sand.u32 %s40, 1
        %s351 = scalar_lea.sflag [#allocation3], %s350
        %s352 = sand.u32 %s40, 1
        %s353 = smul.addr %s352, 8
        %s354 = scalar_lea.vmem [#allocation2], %s353
        %p355 = pneg %p53
        %p356 = pneg %p50
        %s357 = sand.u32 %s32, 1
        %s358 = scalar_lea.sflag [#allocation6], %s357
        %s359 = sand.u32 %s66, 1
        %s360 = smul.addr %s359, 8
        %s361 = scalar_lea.vmem [#allocation5], %s360
        %p362 = pneg %p79
        %p363 = pneg %p76
        %s364 = sand.u32 %s32, 1
        %s365 = scalar_lea.sflag [#allocation6], %s364
        %s366 = sand.u32 %s92, 1
        %s367 = smul.addr %s366, 8
        %s368 = scalar_lea.vmem [#allocation7], %s367
        %p369 = pneg %p105
        %p370 = pneg %p102
        %p371 = pneg %p126
        %p372 = pneg %p123
        %p373 = pneg %p147
        %p374 = pneg %p144
        %p375 = pneg %p168
        %p376 = pneg %p165
        %p377 = pneg %p194
        %p378 = pneg %p191
        %s379 = sand.u32 %s181, 1
        %s380 = scalar_lea.sflag [#allocation4], %s379
        %s381 = sand.u32 %s181, 1
        %s382 = smul.addr %s381, 8
        %s383 = scalar_lea.vmem [#allocation10], %s382
        %p384 = pneg %p220
        %p385 = pneg %p217
        %s386 = sand.u32 %s207, 1
        %s387 = scalar_lea.sflag [#allocation12], %s386
        %s388 = sand.u32 %s207, 1
        %s389 = smul.addr %s388, 8
        %s390 = scalar_lea.vmem [#allocation11], %s389
        %v392 = vld [vmem:[%s323] sm:$0xff]
        %v393 = vpack.c.bf16 %v392, %v392
        %v394 = vld [vmem:[%s332] sm:$0xff]
        %v395 = vpack.c.bf16 %v394, %v394
        %v396 = vld [vmem:[%s3] sm:$0xf]
        %v397 = vld [vmem:[%s3 + $0x4] sm:$0xf]
        %v398 = vld [vmem:[#allocation8] sm:$0xf]
        %v399 = vld [vmem:[#allocation8 + $0x4] sm:$0xf]
        %v400 = vld [vmem:[#allocation8 + $0x8] sm:$0xf]
        %v401 = vld [vmem:[#allocation8 + $0xc] sm:$0xf]
        %v406 = vunpack.c.l.b16 %v398
        %v407 = vunpack.c.l.b16 %v399
        %v408 = vunpack.c.l.b16 %v400
        %v409 = vunpack.c.l.b16 %v401
        %v410 = vpack.c.b16 %v407, %v406
        %v411 = vpack.c.b16 %v409, %v408
        %vm414 = vcmask 261120
        %v416 = vsel %vm414, %v395, 0
        %418 = vmatprep.subr.bf16.mxu0 0
        %419 = vmatpush1.bf16.msra.mxu0 %v410
        %420 = vmatprep.subr.bf16.mxu0 0
        %421 = vmatpush1.bf16.msra.mxu0 %v411
        %422 = vmatprep.subr.bf16.mxu0 0
        %423 = vmatpush1.bf16.msra.mxu0 0
        %424 = vmatprep.subr.bf16.mxu0 0
        %425 = vmatpush1.bf16.msra.mxu0 0
        %426 = vmatprep.subr.bf16.mxu0 0
        %427 = vmatpush1.bf16.msra.mxu0 0
        %428 = vmatprep.subr.bf16.mxu0 0
        %429 = vmatpush1.bf16.msra.mxu0 0
        %430 = vmatprep.subr.bf16.mxu0 0
        %431 = vmatpush1.bf16.msra.mxu0 0
        %432 = vmatprep.subr.bf16.mxu0 0
        %433 = vmatpush1.bf16.msra.mxu0 0
        %434 = vmatprep.subr.bf16.mxu0 0
        %435 = vmatpush1.bf16.msra.mxu0 0
        %436 = vmatprep.subr.bf16.mxu0 0
        %437 = vmatpush1.bf16.msra.mxu0 0
        %438 = vmatprep.subr.bf16.mxu0 0
        %439 = vmatpush1.bf16.msra.mxu0 0
        %440 = vmatprep.subr.bf16.mxu0 0
        %441 = vmatpush1.bf16.msra.mxu0 0
        %442 = vmatprep.subr.bf16.mxu0 0
        %443 = vmatpush1.bf16.msra.mxu0 0
        %444 = vmatprep.subr.bf16.mxu0 0
        %445 = vmatpush1.bf16.msra.mxu0 0
        %446 = vmatprep.subr.bf16.mxu0 0
        %447 = vmatpush1.bf16.msra.mxu0 0
        %448 = vmatprep.subr.bf16.mxu0 0
        %449 = vmatpush1.bf16.msra.mxu0 0
        %450 = vmatprep.mubr.bf16.mxu0 0
        %451 = vmatmul.mubr.bf16.gmra.mrb[0].mxu0 %v416
        %v452 = vpop.f32.mrb[0].mxu0
        %v453 = vadd.f32 0.0, %v452
        %v454 = vpop.f32.mrb[0].mxu0
        %v455 = vpop.f32.mrb[0].mxu0
        %v456 = vpop.f32.mrb[0].mxu0
        %457 = vdwg.mxu0
        %v460 = vunpack.c.l.b16 %v396
        %v461 = vunpack.c.l.b16 %v397
        %v462 = vpack.c.b16 %v461, %v460
        %vm464 = vcmask 130048
        %v466 = vsel %vm464, %v393, 0
        %468 = vmatprep.subr.bf16.mxu0 0
        %469 = vmatpush1.bf16.msra.mxu0 %v462
        %470 = vmatprep.subr.bf16.mxu0 0
        %471 = vmatpush1.bf16.msra.mxu0 0
        %472 = vmatprep.subr.bf16.mxu0 0
        %473 = vmatpush1.bf16.msra.mxu0 0
        %474 = vmatprep.subr.bf16.mxu0 0
        %475 = vmatpush1.bf16.msra.mxu0 0
        %476 = vmatprep.subr.bf16.mxu0 0
        %477 = vmatpush1.bf16.msra.mxu0 0
        %478 = vmatprep.subr.bf16.mxu0 0
        %479 = vmatpush1.bf16.msra.mxu0 0
        %480 = vmatprep.subr.bf16.mxu0 0
        %481 = vmatpush1.bf16.msra.mxu0 0
        %482 = vmatprep.subr.bf16.mxu0 0
        %483 = vmatpush1.bf16.msra.mxu0 0
        %484 = vmatprep.subr.bf16.mxu0 0
        %485 = vmatpush1.bf16.msra.mxu0 0
        %486 = vmatprep.subr.bf16.mxu0 0
        %487 = vmatpush1.bf16.msra.mxu0 0
        %488 = vmatprep.subr.bf16.mxu0 0
        %489 = vmatpush1.bf16.msra.mxu0 0
        %490 = vmatprep.subr.bf16.mxu0 0
        %491 = vmatpush1.bf16.msra.mxu0 0
        %492 = vmatprep.subr.bf16.mxu0 0
        %493 = vmatpush1.bf16.msra.mxu0 0
        %494 = vmatprep.subr.bf16.mxu0 0
        %495 = vmatpush1.bf16.msra.mxu0 0
        %496 = vmatprep.subr.bf16.mxu0 0
        %497 = vmatpush1.bf16.msra.mxu0 0
        %498 = vmatprep.subr.bf16.mxu0 0
        %499 = vmatpush1.bf16.msra.mxu0 0
        %500 = vmatprep.mubr.bf16.mxu0 0
        %501 = vmatmul.mubr.bf16.gmra.mrb[0].mxu0 %v466
        %v502 = vpop.f32.mrb[0].mxu0
        %v503 = vadd.f32 %v453, %v502
        %v504 = vpop.f32.mrb[0].mxu0
        %v505 = vpop.f32.mrb[0].mxu0
        %v506 = vpop.f32.mrb[0].mxu0
        %507 = vdwg.mxu0
        %v508 = vld [vmem:[%s5] sm:$0x1]
        %v510 = vlaneseq
        %v511 = vshrl.u32 %v510, 7
        %v512 = vsub.s32 0, %v511
        %v513 = vrot.slane %v508, %v512
        %v515 = vadd.f32 %v503, %v513
        %v516 = vsel %vm414, %v515, -inf
        %517 = vmax.xlane.f32.xlu0 %v516
        %v518 = vpop.xlane.xlu0 %517
        %v519 = vsub.f32 %v515, %v518
        %v520 = vmul.f32 %v519, 1.442695
        %v521 = vpow.pop %v520
        %v522 = vsel %vm414, %v521, 0.0
        %523 = vadd.xlane.f32.xlu0 %v522
        %v524 = vpop.xlane.xlu0 %523
        %v525 = vrcp.pop %v524
        %v526 = vmul.f32 %v521, %v525
        %vm527 = vcmask 523520
        %v528 = vsel %vm527, %v515, -inf
        %529 = vmax.xlane.f32.xlu0 %v528
        %v530 = vpop.xlane.xlu0 %529
        %v531 = vsub.f32 %v515, %v530
        %v532 = vmul.f32 %v531, 1.442695
        %v533 = vpow.pop %v532
        %535 = vrot.lane.b32.xlu0 %v533, 96
        %v536 = vpop.permute.xlu0 %535
        %v538 = vsel %vm414, %v536, 0.0
        %539 = vadd.xlane.f32.xlu0 %v538
        %v540 = vpop.xlane.xlu0 %539
        %v541 = vrcp.pop %v540
        %v542 = vmul.f32 %v533, %v541
        %v543 = vtanh.pop %v515
        %vm544 = vcmask 1048320
        %v545 = vsel %vm544, %v515, -inf
        %546 = vmax.xlane.f32.xlu0 %v545
        %v547 = vpop.xlane.xlu0 %546
        %v548 = vsub.f32 %v515, %v547
        %v549 = vmul.f32 %v548, 1.442695
        %v550 = vpow.pop %v549
        %552 = vrot.lane.b32.xlu0 %v550, 32
        %v553 = vpop.permute.xlu0 %552
        %v555 = vsel %vm414, %v553, 0.0
        %556 = vadd.xlane.f32.xlu0 %v555
        %v557 = vpop.xlane.xlu0 %556
        %v558 = vrcp.pop %v557
        %v559 = vmul.f32 %v550, %v558
        %v560 = vld [vmem:[%s341] sm:$0xff]
        %v561 = vmul.f32 %v560, %v526
        %563 = vrot.lane.b32.xlu0 %v543, 96
        %v564 = vpop.permute.xlu0 %563
        %v566 = vmul.f32 %v542, %v564
        %568 = vrot.lane.b32.xlu0 %v566, 96
        %v569 = vpop.permute.xlu0 %568
        %v571 = vadd.f32 %v561, %v569
        %v572 = vtanh.pop %v571
        %574 = vrot.lane.b32.xlu0 %v559, 32
        %v575 = vpop.permute.xlu0 %574
        %v577 = vmul.f32 %v572, %v575
        %578 = vst.msk [vmem:[%s383] sm:$0xff] %vm414, %v577
        %579 = vst.msk [vmem:[%s390] sm:$0xff] %vm414, %v571
        %s580 = sand.u32 %s181, 1
        %s581 = scalar_lea.sflag [#allocation4], %s580
        %s582 = sand.u32 %s181, 1
        %s583 = smul.addr %s582, 8
        %s584 = scalar_lea.vmem [#allocation10], %s583
        %s585 = sand.u32 %s207, 1
        %s586 = scalar_lea.sflag [#allocation12], %s585
        %s587 = sand.u32 %s207, 1
        %s588 = smul.addr %s587, 8
        %s589 = scalar_lea.vmem [#allocation11], %s588
        // Predicated region
        $region61: #{tpu_custom_call.1} parent=43 // pred_check
          %p590 = pneg %p191
        $region62: #{tpu_custom_call.1} parent=43 // pred_check_branch
          %592 = sbr.rel (%p590) target = $region64
        $region63: #{tpu_custom_call.1} parent=43 // pred_region
          %s594 = ssub.s32 128, 128
          %595 = vsyncadd %s581, %s594
          %s596 = smul.addr %s32, 128
          %s597 = scalar_lea.hbm %s6, %s596
          %s599 = sshll.u32 %s584, 4
          %s600 = int_to_ptr.vmem [resolvable:$true] %s599
          %602 = dma.vmem_to_hbm [thread:$0]  %s600, 128, %s597, %s581
        $region64: #{tpu_custom_call.1} parent=43 // pred_fallthru
          _
        // Predicated region
        $region65: #{tpu_custom_call.1} parent=43 // pred_check
          %p603 = pneg %p217
        $region66: #{tpu_custom_call.1} parent=43 // pred_check_branch
          %605 = sbr.rel (%p603) target = $region68
        $region67: #{tpu_custom_call.1} parent=43 // pred_region
          %s607 = ssub.s32 128, 128
          %608 = vsyncadd %s586, %s607
          %s609 = smul.addr %s32, 128
          %s610 = scalar_lea.hbm %s7, %s609
          %s612 = sshll.u32 %s589, 4
          %s613 = int_to_ptr.vmem [resolvable:$true] %s612
          %615 = dma.vmem_to_hbm [thread:$0]  %s613, 128, %s610, %s586
        $region68: #{tpu_custom_call.1} parent=43 // pred_fallthru
          _
      $region44: #{tpu_custom_call.1} parent=5 // pred_fallthru
        _
      %p616 = scmp.le.s32.totalorder 2, %s27
      // Predicated region
      $region69: #{tpu_custom_call.1} parent=5 // pred_check
        %p617 = pneg %p616
      $region70: #{tpu_custom_call.1} parent=5 // pred_check_branch
        %619 = sbr.rel (%p617) target = $region72
      $region71: #{tpu_custom_call.1} parent=5 // pred_region
        %s620 = ssub.s32 %s27, 2
        // Predicated region
        $region73: #{tpu_custom_call.1} parent=71 // pred_check
          %p621 = pneg %p197
        $region74: #{tpu_custom_call.1} parent=71 // pred_check_branch
          %623 = sbr.rel (%p621) target = $region76
        $region75: #{tpu_custom_call.1} parent=71 // pred_region
          %s624 = sand.u32 %s182, 1
          %s625 = scalar_lea.sflag [#allocation4], %s624
          %s626 = sand.u32 %s182, 1
          %s627 = smul.addr %s626, 8
          %s628 = scalar_lea.vmem [#allocation10], %s627
          %629 = dma.done %s625, 128
        $region76: #{tpu_custom_call.1} parent=71 // pred_fallthru
          _
        // Predicated region
        $region77: #{tpu_custom_call.1} parent=71 // pred_check
          %p630 = pneg %p223
        $region78: #{tpu_custom_call.1} parent=71 // pred_check_branch
          %632 = sbr.rel (%p630) target = $region80
        $region79: #{tpu_custom_call.1} parent=71 // pred_region
          %s633 = sand.u32 %s208, 1
          %s634 = scalar_lea.sflag [#allocation12], %s633
          %s635 = sand.u32 %s208, 1
          %s636 = smul.addr %s635, 8
          %s637 = scalar_lea.vmem [#allocation11], %s636
          %638 = dma.done %s634, 128
        $region80: #{tpu_custom_call.1} parent=71 // pred_fallthru
          _
      $region72: #{tpu_custom_call.1} parent=5 // pred_fallthru
        _
    $region6: #{tpu_custom_call.1} parent=1 // loop_footer
      %s31 = sadd.s32 1, %s27
    $region7: #{tpu_custom_call.1} parent=1 // loop_footer_branch
      %26 = sbr.rel target = $region3
    $region8: #{tpu_custom_call.1} parent=1 // loop_exit
      _
    %639 = vsyncpa [#allocation3], 1
    %s640 = scalar_lea.sflag [#allocation3], 1
    %641 = vsyncpa %s640, 1
    %642 = vsyncpa [#allocation6], 1
    %s643 = scalar_lea.sflag [#allocation6], 1
    %644 = vsyncpa %s643, 1
    %645 = vsyncpa [#allocation9], 1
    %646 = vsyncpa [#allocation4], 1
    %s647 = scalar_lea.sflag [#allocation4], 1
    %648 = vsyncpa %s647, 1
    %649 = vsyncpa [#allocation12], 1
    %s650 = scalar_lea.sflag [#allocation12], 1
    %651 = vsyncpa %s650, 1

// kernel: tpu_custom_call.1
$region0: #{tpu_custom_call.1}
  #allocation0 [shape = 'u32[]', space=smem, size = 0x4, offset = 0x4, fixed_abs, tag = 'smem constant byte address 0x4 - core index']
  #allocation1 [shape = 'u32[144,128]{1,0:T(1,128)}', space=vmem, size = 0x12000, scoped, tag = 'internal scratch']
  %s0 = inlined_call_operand.hbm [shape: f32[16,16], index: 0, kind: input, shape index: {}]
  %s1 = inlined_call_operand.hbm [shape: f32[16,32], index: 1, kind: input, shape index: {}]
  %s2 = inlined_call_operand.hbm [shape: f32[16,32], index: 2, kind: input, shape index: {}]
  %s3 = inlined_call_operand.vmem [shape: bf16[16,128], index: 3, kind: input, shape index: {}]
  %s4 = inlined_call_operand.hbm [shape: bf16[32,128], index: 4, kind: input, shape index: {}]
  %s5 = inlined_call_operand.vmem [shape: f32[1,128], index: 5, kind: input, shape index: {}]
  %s6 = inlined_call_operand.hbm [shape: f32[16,32], index: 6, kind: output, shape index: {0}]
  %s7 = inlined_call_operand.hbm [shape: f32[16,32], index: 7, kind: output, shape index: {1}]
  %8 = xla_tuple %s6, %s7
  %s9 = sld [smem:[#allocation0]]
  $region81: #{tpu_custom_call.1} parent=0
    _
  %s11 = ssub.s32 1, %s9
  %s12 = scalar_select 0, %s11, %s9
  $region1: #{tpu_custom_call.1} parent=0
    #allocation2 [shape = 'u8[8192]{0}', space=vmem, size = 0x2000, scoped, tag = 'input window, operand 0']
    #allocation3 [shape = 's32[2]{0}', space=sflag, size = 0x8, scoped, tag = 'scoped memory for tpu_custom_call.1']
    #allocation4 [shape = 's32[2]{0}', space=sflag, size = 0x8, scoped, tag = 'scoped memory for tpu_custom_call.1']
    #allocation5 [shape = 'u8[8192]{0}', space=vmem, size = 0x2000, scoped, tag = 'input window, operand 1']
    #allocation6 [shape = 's32[2]{0}', space=sflag, size = 0x8, scoped, tag = 'scoped memory for tpu_custom_call.1']
    #allocation7 [shape = 'u8[8192]{0}', space=vmem, size = 0x2000, scoped, tag = 'input window, operand 2']
    #allocation8 [shape = 'u8[8192]{0}', space=vmem, size = 0x2000, scoped, tag = 'input window, operand 4, single buffered']
    #allocation9 [shape = 's32[1]{0}', space=sflag, size = 0x4, scoped, tag = 'scoped memory for tpu_custom_call.1']
    #allocation10 [shape = 'u8[8192]{0}', space=vmem, size = 0x2000, scoped, tag = 'output window, operand 0']
    #allocation11 [shape = 'u8[8192]{0}', space=vmem, size = 0x2000, scoped, tag = 'output window, operand 1']
    #allocation12 [shape = 's32[2]{0}', space=sflag, size = 0x8, scoped, tag = 'scoped memory for tpu_custom_call.1']
    %13 = vsyncpa [#allocation3], 0
    %s14 = scalar_lea.sflag [#allocation3], 1
    %15 = vsyncpa %s14, 0
    %16 = vsyncpa [#allocation6], 0
    %s17 = scalar_lea.sflag [#allocation6], 1
    %18 = vsyncpa %s17, 0
    %19 = vsyncpa [#allocation9], 0
    %20 = vsyncpa [#allocation4], 0
    %s21 = scalar_lea.sflag [#allocation4], 1
    %22 = vsyncpa %s21, 0
    %23 = vsyncpa [#allocation12], 0
    %s24 = scalar_lea.sflag [#allocation12], 1
    %25 = vsyncpa %s24, 0
    loop: start=0, step=1, limit=4
    $region2: #{tpu_custom_call.1} parent=1 // loop_pre_header
      _
    $region3: #{tpu_custom_call.1} parent=1 // loop_header
      %s27 = sphi 0, %s31
      %p28 = scmp.ge.s32.totalorder %s27, 4
      %s37 = sphi 0, %s39
      %s40 = sphi 0, %s37
      %s41 = sphi 0, %s40
      %s57 = sphi 0, %s41
      %s63 = sphi 0, %s65
      %s66 = sphi 0, %s63
      %s67 = sphi 0, %s66
      %s83 = sphi 0, %s67
      %s89 = sphi 0, %s91
      %s92 = sphi 0, %s89
      %s93 = sphi 0, %s92
      %s109 = sphi 0, %s93
      %s113 = sphi 0, %s113
      %s115 = sphi 0, %s113
      %s116 = sphi 0, %s115
      %s130 = sphi 0, %s116
      %s134 = sphi 0, %s134
      %s136 = sphi 0, %s134
      %s137 = sphi 0, %s136
      %s151 = sphi 0, %s137
      %s155 = sphi 0, %s155
      %s157 = sphi 0, %s155
      %s158 = sphi 0, %s157
      %s172 = sphi 0, %s158
      %s178 = sphi 0, %s180
      %s181 = sphi 0, %s178
      %s182 = sphi 0, %s181
      %s198 = sphi 0, %s182
      %s204 = sphi 0, %s206
      %s207 = sphi 0, %s204
      %s208 = sphi 0, %s207
      %s224 = sphi 0, %s208
    $region4: #{tpu_custom_call.1} parent=1 // loop_header_branch
      %30 = sbr.rel (%p28) target = $region8
    $region5: #{tpu_custom_call.1} parent=1 // loop_body
      %s32 = ssub.s32 %s27, 1
      %s33 = ssub.s32 %s27, 2
      %s34 = sadd.s32 %s27, 1
      %s35 = ssub.s32 %s27, %s34
      %p36 = scmp.eq.s32.totalorder %s35, 0
      %s38 = sadd.s32 %s37, 1
      %s39 = scalar_select %p36, %s37, %s38
      %p42 = pneg %p36
      %p43 = scmp.eq.s32.totalorder %s27, 1
      %p44 = por %p42, %p43
      %p45 = scmp.ne.s32.totalorder %s37, %s40
      %p46 = scmp.eq.s32.totalorder %s27, 0
      %p47 = por %p45, %p46
      %p48 = scmp.ne.s32.totalorder %s37, %s40
      %p49 = scmp.eq.s32.totalorder %s32, 1
      %p50 = por %p48, %p49
      %p51 = scmp.ne.s32.totalorder %s40, %s41
      %p52 = scmp.eq.s32.totalorder %s32, 0
      %p53 = por %p51, %p52
      %p54 = scmp.ne.s32.totalorder %s40, %s41
      %p55 = scmp.eq.s32.totalorder %s33, 1
      %p56 = por %p54, %p55
      %p58 = scmp.ne.s32.totalorder %s41, %s57
      %p59 = scmp.eq.s32.totalorder %s33, 0
      %p60 = por %p58, %p59
      %s61 = ssub.s32 %s27, %s34
      %p62 = scmp.eq.s32.totalorder %s61, 0
      %s64 = sadd.s32 %s63, 1
      %s65 = scalar_select %p62, %s63, %s64
      %p68 = pneg %p62
      %p69 = scmp.eq.s32.totalorder %s27, 1
      %p70 = por %p68, %p69
      %p71 = scmp.ne.s32.totalorder %s63, %s66
      %p72 = scmp.eq.s32.totalorder %s27, 0
      %p73 = por %p71, %p72
      %p74 = scmp.ne.s32.totalorder %s63, %s66
      %p75 = scmp.eq.s32.totalorder %s32, 1
      %p76 = por %p74, %p75
      %p77 = scmp.ne.s32.totalorder %s66, %s67
      %p78 = scmp.eq.s32.totalorder %s32, 0
      %p79 = por %p77, %p78
      %p80 = scmp.ne.s32.totalorder %s66, %s67
      %p81 = scmp.eq.s32.totalorder %s33, 1
      %p82 = por %p80, %p81
      %p84 = scmp.ne.s32.totalorder %s67, %s83
      %p85 = scmp.eq.s32.totalorder %s33, 0
      %p86 = por %p84, %p85
      %s87 = ssub.s32 %s27, %s34
      %p88 = scmp.eq.s32.totalorder %s87, 0
      %s90 = sadd.s32 %s89, 1
      %s91 = scalar_select %p88, %s89, %s90
      %p94 = pneg %p88
      %p95 = scmp.eq.s32.totalorder %s27, 1
      %p96 = por %p94, %p95
      %p97 = scmp.ne.s32.totalorder %s89, %s92
      %p98 = scmp.eq.s32.totalorder %s27, 0
      %p99 = por %p97, %p98
      %p100 = scmp.ne.s32.totalorder %s89, %s92
      %p101 = scmp.eq.s32.totalorder %s32, 1
      %p102 = por %p100, %p101
      %p103 = scmp.ne.s32.totalorder %s92, %s93
      %p104 = scmp.eq.s32.totalorder %s32, 0
      %p105 = por %p103, %p104
      %p106 = scmp.ne.s32.totalorder %s92, %s93
      %p107 = scmp.eq.s32.totalorder %s33, 1
      %p108 = por %p106, %p107
      %p110 = scmp.ne.s32.totalorder %s93, %s109
      %p111 = scmp.eq.s32.totalorder %s33, 0
      %p112 = por %p110, %p111
      %s114 = sadd.s32 %s113, 1
      %p117 = scmp.eq.s32.totalorder %s27, 1
      %p118 = scmp.ne.s32.totalorder %s113, %s115
      %p119 = scmp.eq.s32.totalorder %s27, 0
      %p120 = por %p118, %p119
      %p121 = scmp.ne.s32.totalorder %s113, %s115
      %p122 = scmp.eq.s32.totalorder %s32, 1
      %p123 = por %p121, %p122
      %p124 = scmp.ne.s32.totalorder %s115, %s116
      %p125 = scmp.eq.s32.totalorder %s32, 0
      %p126 = por %p124, %p125
      %p127 = scmp.ne.s32.totalorder %s115, %s116
      %p128 = scmp.eq.s32.totalorder %s33, 1
      %p129 = por %p127, %p128
      %p131 = scmp.ne.s32.totalorder %s116, %s130
      %p132 = scmp.eq.s32.totalorder %s33, 0
      %p133 = por %p131, %p132
      %s135 = sadd.s32 %s134, 1
      %p138 = scmp.eq.s32.totalorder %s27, 1
      %p139 = scmp.ne.s32.totalorder %s134, %s136
      %p140 = scmp.eq.s32.totalorder %s27, 0
      %p141 = por %p139, %p140
      %p142 = scmp.ne.s32.totalorder %s134, %s136
      %p143 = scmp.eq.s32.totalorder %s32, 1
      %p144 = por %p142, %p143
      %p145 = scmp.ne.s32.totalorder %s136, %s137
      %p146 = scmp.eq.s32.totalorder %s32, 0
      %p147 = por %p145, %p146
      %p148 = scmp.ne.s32.totalorder %s136, %s137
      %p149 = scmp.eq.s32.totalorder %s33, 1
      %p150 = por %p148, %p149
      %p152 = scmp.ne.s32.totalorder %s137, %s151
      %p153 = scmp.eq.s32.totalorder %s33, 0
      %p154 = por %p152, %p153
      %s156 = sadd.s32 %s155, 1
      %p159 = scmp.eq.s32.totalorder %s27, 1
      %p160 = scmp.ne.s32.totalorder %s155, %s157
      %p161 = scmp.eq.s32.totalorder %s27, 0
      %p162 = por %p160, %p161
      %p163 = scmp.ne.s32.totalorder %s155, %s157
      %p164 = scmp.eq.s32.totalorder %s32, 1
      %p165 = por %p163, %p164
      %p166 = scmp.ne.s32.totalorder %s157, %s158
      %p167 = scmp.eq.s32.totalorder %s32, 0
      %p168 = por %p166, %p167
      %p169 = scmp.ne.s32.totalorder %s157, %s158
      %p170 = scmp.eq.s32.totalorder %s33, 1
      %p171 = por %p169, %p170
      %p173 = scmp.ne.s32.totalorder %s158, %s172
      %p174 = scmp.eq.s32.totalorder %s33, 0
      %p175 = por %p173, %p174
      %s176 = ssub.s32 %s27, %s34
      %p177 = scmp.eq.s32.totalorder %s176, 0
      %s179 = sadd.s32 %s178, 1
      %s180 = scalar_select %p177, %s178, %s179
      %p183 = pneg %p177
      %p184 = scmp.eq.s32.totalorder %s27, 1
      %p185 = por %p183, %p184
      %p186 = scmp.ne.s32.totalorder %s178, %s181
      %p187 = scmp.eq.s32.totalorder %s27, 0
      %p188 = por %p186, %p187
      %p189 = scmp.ne.s32.totalorder %s178, %s181
      %p190 = scmp.eq.s32.totalorder %s32, 1
      %p191 = por %p189, %p190
      %p192 = scmp.ne.s32.totalorder %s181, %s182
      %p193 = scmp.eq.s32.totalorder %s32, 0
      %p194 = por %p192, %p193
      %p195 = scmp.ne.s32.totalorder %s181, %s182
      %p196 = scmp.eq.s32.totalorder %s33, 1
      %p197 = por %p195, %p196
      %p199 = scmp.ne.s32.totalorder %s182, %s198
      %p200 = scmp.eq.s32.totalorder %s33, 0
      %p201 = por %p199, %p200
      %s202 = ssub.s32 %s27, %s34
      %p203 = scmp.eq.s32.totalorder %s202, 0
      %s205 = sadd.s32 %s204, 1
      %s206 = scalar_select %p203, %s204, %s205
      %p209 = pneg %p203
      %p210 = scmp.eq.s32.totalorder %s27, 1
      %p211 = por %p209, %p210
      %p212 = scmp.ne.s32.totalorder %s204, %s207
      %p213 = scmp.eq.s32.totalorder %s27, 0
      %p214 = por %p212, %p213
      %p215 = scmp.ne.s32.totalorder %s204, %s207
      %p216 = scmp.eq.s32.totalorder %s32, 1
      %p217 = por %p215, %p216
      %p218 = scmp.ne.s32.totalorder %s207, %s208
      %p219 = scmp.eq.s32.totalorder %s32, 0
      %p220 = por %p218, %p219
      %p221 = scmp.ne.s32.totalorder %s207, %s208
      %p222 = scmp.eq.s32.totalorder %s33, 1
      %p223 = por %p221, %p222
      %p225 = scmp.ne.s32.totalorder %s208, %s224
      %p226 = scmp.eq.s32.totalorder %s33, 0
      %p227 = por %p225, %p226
      %p228 = scmp.le.s32.totalorder 1, %s27
      %p229 = scmp.lt.s32.totalorder %s27, 3
      %p230 = pnand %p228, %p229
      %p231 = pneg %p230
      // Predicated region
      $region9: #{tpu_custom_call.1} parent=5 // pred_check
        _
      $region10: #{tpu_custom_call.1} parent=5 // pred_check_branch
        %233 = sbr.rel (%p230) target = $region12
      $region11: #{tpu_custom_call.1} parent=5 // pred_region
        %s234 = ssub.s32 %s27, 1
        // Predicated region
        $region13: #{tpu_custom_call.1} parent=11 // pred_check
          %p235 = pneg %p126
        $region14: #{tpu_custom_call.1} parent=11 // pred_check_branch
          %237 = sbr.rel (%p235) target = $region16
        $region15: #{tpu_custom_call.1} parent=11 // pred_region
          _
        $region16: #{tpu_custom_call.1} parent=11 // pred_fallthru
          _
        // Predicated region
        $region17: #{tpu_custom_call.1} parent=11 // pred_check
          %p238 = pneg %p147
        $region18: #{tpu_custom_call.1} parent=11 // pred_check_branch
          %240 = sbr.rel (%p238) target = $region20
        $region19: #{tpu_custom_call.1} parent=11 // pred_region
          %s242 = ssub.s32 256, 256
          %243 = vsyncadd [#allocation9], %s242
          %s244 = sshll.u32 [#allocation8], 4
          %s245 = int_to_ptr.vmem [resolvable:$true] %s244
          %250 = dma.hbm_to_vmem [thread:$0]  %s4, 256, %s245, [#allocation9], 64, 64, 4
        $region20: #{tpu_custom_call.1} parent=11 // pred_fallthru
          _
        // Predicated region
        $region21: #{tpu_custom_call.1} parent=11 // pred_check
          %p251 = pneg %p168
        $region22: #{tpu_custom_call.1} parent=11 // pred_check_branch
          %253 = sbr.rel (%p251) target = $region24
        $region23: #{tpu_custom_call.1} parent=11 // pred_region
          _
        $region24: #{tpu_custom_call.1} parent=11 // pred_fallthru
          _
      $region12: #{tpu_custom_call.1} parent=5 // pred_fallthru
        _
      %p254 = scmp.lt.s32.totalorder %s27, 2
      // Predicated region
      $region25: #{tpu_custom_call.1} parent=5 // pred_check
        %p255 = pneg %p254
      $region26: #{tpu_custom_call.1} parent=5 // pred_check_branch
        %257 = sbr.rel (%p255) target = $region28
      $region27: #{tpu_custom_call.1} parent=5 // pred_region
        // Predicated region
        $region29: #{tpu_custom_call.1} parent=27 // pred_check
          %p258 = pneg %p47
        $region30: #{tpu_custom_call.1} parent=27 // pred_check_branch
          %260 = sbr.rel (%p258) target = $region32
        $region31: #{tpu_custom_call.1} parent=27 // pred_region
          %s261 = sand.u32 %s37, 1
          %s262 = scalar_lea.sflag [#allocation3], %s261
          %s263 = sand.u32 %s37, 1
          %s264 = smul.addr %s263, 8
          %s265 = scalar_lea.vmem [#allocation2], %s264
          %s267 = ssub.s32 128, 128
          %268 = vsyncadd %s262, %s267
          %s269 = smul.addr %s27, 128
          %s270 = scalar_lea.hbm %s0, %s269
          %s272 = sshll.u32 %s265, 4
          %s273 = int_to_ptr.vmem [resolvable:$true] %s272
          %275 = dma.hbm_to_vmem [thread:$0]  %s270, 128, %s273, %s262
        $region32: #{tpu_custom_call.1} parent=27 // pred_fallthru
          _
        // Predicated region
        $region33: #{tpu_custom_call.1} parent=27 // pred_check
          %p276 = pneg %p73
        $region34: #{tpu_custom_call.1} parent=27 // pred_check_branch
          %278 = sbr.rel (%p276) target = $region36
        $region35: #{tpu_custom_call.1} parent=27 // pred_region
          %s279 = sand.u32 %s27, 1
          %s280 = scalar_lea.sflag [#allocation6], %s279
          %s281 = sand.u32 %s63, 1
          %s282 = smul.addr %s281, 8
          %s283 = scalar_lea.vmem [#allocation5], %s282
          %s285 = ssub.s32 128, 128
          %286 = vsyncadd %s280, %s285
          %s287 = smul.addr %s27, 128
          %s288 = scalar_lea.hbm %s1, %s287
          %s290 = sshll.u32 %s283, 4
          %s291 = int_to_ptr.vmem [resolvable:$true] %s290
          %293 = dma.hbm_to_vmem [thread:$0]  %s288, 128, %s291, %s280
        $region36: #{tpu_custom_call.1} parent=27 // pred_fallthru
          _
        // Predicated region
        $region37: #{tpu_custom_call.1} parent=27 // pred_check
          %p294 = pneg %p99
        $region38: #{tpu_custom_call.1} parent=27 // pred_check_branch
          %296 = sbr.rel (%p294) target = $region40
        $region39: #{tpu_custom_call.1} parent=27 // pred_region
          %s297 = sand.u32 %s27, 1
          %s298 = scalar_lea.sflag [#allocation6], %s297
          %s299 = sand.u32 %s89, 1
          %s300 = smul.addr %s299, 8
          %s301 = scalar_lea.vmem [#allocation7], %s300
          %s303 = ssub.s32 128, 128
          %304 = vsyncadd %s298, %s303
          %s305 = smul.addr %s27, 128
          %s306 = scalar_lea.hbm %s2, %s305
          %s308 = sshll.u32 %s301, 4
          %s309 = int_to_ptr.vmem [resolvable:$true] %s308
          %311 = dma.hbm_to_vmem [thread:$0]  %s306, 128, %s309, %s298
        $region40: #{tpu_custom_call.1} parent=27 // pred_fallthru
          _
      $region28: #{tpu_custom_call.1} parent=5 // pred_fallthru
        _
      %p312 = scmp.le.s32.totalorder 1, %s27
      %p313 = scmp.lt.s32.totalorder %s27, 3
      %p314 = pnand %p312, %p313
      %p315 = pneg %p314
      // Predicated region
      $region41: #{tpu_custom_call.1} parent=5 // pred_check
        _
      $region42: #{tpu_custom_call.1} parent=5 // pred_check_branch
        %317 = sbr.rel (%p314) target = $region44
      $region43: #{tpu_custom_call.1} parent=5 // pred_region
        %s318 = ssub.s32 %s27, 1
        %s319 = sand.u32 %s40, 1
        %s320 = scalar_lea.sflag [#allocation3], %s319
        %s321 = sand.u32 %s40, 1
        %s322 = smul.addr %s321, 8
        %s323 = scalar_lea.vmem [#allocation2], %s322
        // Predicated region
        $region45: #{tpu_custom_call.1} parent=43 // pred_check
          %p324 = pneg %p53
        $region46: #{tpu_custom_call.1} parent=43 // pred_check_branch
          %326 = sbr.rel (%p324) target = $region48
        $region47: #{tpu_custom_call.1} parent=43 // pred_region
          %327 = dma.done %s320, 128
        $region48: #{tpu_custom_call.1} parent=43 // pred_fallthru
          _
        %s328 = sand.u32 %s32, 1
        %s329 = scalar_lea.sflag [#allocation6], %s328
        %s330 = sand.u32 %s66, 1
        %s331 = smul.addr %s330, 8
        %s332 = scalar_lea.vmem [#allocation5], %s331
        // Predicated region
        $region49: #{tpu_custom_call.1} parent=43 // pred_check
          %p333 = pneg %p79
        $region50: #{tpu_custom_call.1} parent=43 // pred_check_branch
          %335 = sbr.rel (%p333) target = $region52
        $region51: #{tpu_custom_call.1} parent=43 // pred_region
          %336 = dma.done %s329, 128
        $region52: #{tpu_custom_call.1} parent=43 // pred_fallthru
          _
        %s337 = sand.u32 %s32, 1
        %s338 = scalar_lea.sflag [#allocation6], %s337
        %s339 = sand.u32 %s92, 1
        %s340 = smul.addr %s339, 8
        %s341 = scalar_lea.vmem [#allocation7], %s340
        // Predicated region
        $region53: #{tpu_custom_call.1} parent=43 // pred_check
          %p342 = pneg %p105
        $region54: #{tpu_custom_call.1} parent=43 // pred_check_branch
          %344 = sbr.rel (%p342) target = $region56
        $region55: #{tpu_custom_call.1} parent=43 // pred_region
          %345 = dma.done %s338, 128
        $region56: #{tpu_custom_call.1} parent=43 // pred_fallthru
          _
        // Predicated region
        $region57: #{tpu_custom_call.1} parent=43 // pred_check
          %p346 = pneg %p147
        $region58: #{tpu_custom_call.1} parent=43 // pred_check_branch
          %348 = sbr.rel (%p346) target = $region60
        $region59: #{tpu_custom_call.1} parent=43 // pred_region
          %349 = dma.done [#allocation9], 256
        $region60: #{tpu_custom_call.1} parent=43 // pred_fallthru
          _
        %s350 = sand.u32 %s40, 1
        %s351 = scalar_lea.sflag [#allocation3], %s350
        %s352 = sand.u32 %s40, 1
        %s353 = smul.addr %s352, 8
        %s354 = scalar_lea.vmem [#allocation2], %s353
        %p355 = pneg %p53
        %p356 = pneg %p50
        %s357 = sand.u32 %s32, 1
        %s358 = scalar_lea.sflag [#allocation6], %s357
        %s359 = sand.u32 %s66, 1
        %s360 = smul.addr %s359, 8
        %s361 = scalar_lea.vmem [#allocation5], %s360
        %p362 = pneg %p79
        %p363 = pneg %p76
        %s364 = sand.u32 %s32, 1
        %s365 = scalar_lea.sflag [#allocation6], %s364
        %s366 = sand.u32 %s92, 1
        %s367 = smul.addr %s366, 8
        %s368 = scalar_lea.vmem [#allocation7], %s367
        %p369 = pneg %p105
        %p370 = pneg %p102
        %p371 = pneg %p126
        %p372 = pneg %p123
        %p373 = pneg %p147
        %p374 = pneg %p144
        %p375 = pneg %p168
        %p376 = pneg %p165
        %p377 = pneg %p194
        %p378 = pneg %p191
        %s379 = sand.u32 %s181, 1
        %s380 = scalar_lea.sflag [#allocation4], %s379
        %s381 = sand.u32 %s181, 1
        %s382 = smul.addr %s381, 8
        %s383 = scalar_lea.vmem [#allocation10], %s382
        %p384 = pneg %p220
        %p385 = pneg %p217
        %s386 = sand.u32 %s207, 1
        %s387 = scalar_lea.sflag [#allocation12], %s386
        %s388 = sand.u32 %s207, 1
        %s389 = smul.addr %s388, 8
        %s390 = scalar_lea.vmem [#allocation11], %s389
        %v392 = vld [vmem:[%s323] sm:$0xff]
        %v393 = vpack.c.bf16 %v392, %v392
        %v394 = vld [vmem:[%s332] sm:$0xff]
        %v395 = vpack.c.bf16 %v394, %v394
        %v396 = vld [vmem:[%s3] sm:$0xf]
        %v397 = vld [vmem:[%s3 + $0x4] sm:$0xf]
        %v398 = vld [vmem:[#allocation8] sm:$0xf]
        %v399 = vld [vmem:[#allocation8 + $0x4] sm:$0xf]
        %v400 = vld [vmem:[#allocation8 + $0x8] sm:$0xf]
        %v401 = vld [vmem:[#allocation8 + $0xc] sm:$0xf]
        %v406 = vunpack.c.l.b16 %v398
        %v407 = vunpack.c.l.b16 %v399
        %v408 = vunpack.c.l.b16 %v400
        %v409 = vunpack.c.l.b16 %v401
        %v410 = vpack.c.b16 %v407, %v406
        %v411 = vpack.c.b16 %v409, %v408
        %vm414 = vcmask 261120
        %v416 = vsel %vm414, %v395, 0
        %418 = vmatprep.subr.bf16.mxu0 0
        %419 = vmatpush1.bf16.msra.mxu0 %v410
        %420 = vmatprep.subr.bf16.mxu0 0
        %421 = vmatpush1.bf16.msra.mxu0 %v411
        %422 = vmatprep.subr.bf16.mxu0 0
        %423 = vmatpush1.bf16.msra.mxu0 0
        %424 = vmatprep.subr.bf16.mxu0 0
        %425 = vmatpush1.bf16.msra.mxu0 0
        %426 = vmatprep.subr.bf16.mxu0 0
        %427 = vmatpush1.bf16.msra.mxu0 0
        %428 = vmatprep.subr.bf16.mxu0 0
        %429 = vmatpush1.bf16.msra.mxu0 0
        %430 = vmatprep.subr.bf16.mxu0 0
        %431 = vmatpush1.bf16.msra.mxu0 0
        %432 = vmatprep.subr.bf16.mxu0 0
        %433 = vmatpush1.bf16.msra.mxu0 0
        %434 = vmatprep.subr.bf16.mxu0 0
        %435 = vmatpush1.bf16.msra.mxu0 0
        %436 = vmatprep.subr.bf16.mxu0 0
        %437 = vmatpush1.bf16.msra.mxu0 0
        %438 = vmatprep.subr.bf16.mxu0 0
        %439 = vmatpush1.bf16.msra.mxu0 0
        %440 = vmatprep.subr.bf16.mxu0 0
        %441 = vmatpush1.bf16.msra.mxu0 0
        %442 = vmatprep.subr.bf16.mxu0 0
        %443 = vmatpush1.bf16.msra.mxu0 0
        %444 = vmatprep.subr.bf16.mxu0 0
        %445 = vmatpush1.bf16.msra.mxu0 0
        %446 = vmatprep.subr.bf16.mxu0 0
        %447 = vmatpush1.bf16.msra.mxu0 0
        %448 = vmatprep.subr.bf16.mxu0 0
        %449 = vmatpush1.bf16.msra.mxu0 0
        %450 = vmatprep.mubr.bf16.mxu0 0
        %451 = vmatmul.mubr.bf16.gmra.mrb[0].mxu0 %v416
        %v452 = vpop.f32.mrb[0].mxu0
        %v453 = vadd.f32 0.0, %v452
        %v454 = vpop.f32.mrb[0].mxu0
        %v455 = vpop.f32.mrb[0].mxu0
        %v456 = vpop.f32.mrb[0].mxu0
        %457 = vdwg.mxu0
        %v460 = vunpack.c.l.b16 %v396
        %v461 = vunpack.c.l.b16 %v397
        %v462 = vpack.c.b16 %v461, %v460
        %vm464 = vcmask 130048
        %v466 = vsel %vm464, %v393, 0
        %468 = vmatprep.subr.bf16.mxu0 0
        %469 = vmatpush1.bf16.msra.mxu0 %v462
        %470 = vmatprep.subr.bf16.mxu0 0
        %471 = vmatpush1.bf16.msra.mxu0 0
        %472 = vmatprep.subr.bf16.mxu0 0
        %473 = vmatpush1.bf16.msra.mxu0 0
        %474 = vmatprep.subr.bf16.mxu0 0
        %475 = vmatpush1.bf16.msra.mxu0 0
        %476 = vmatprep.subr.bf16.mxu0 0
        %477 = vmatpush1.bf16.msra.mxu0 0
        %478 = vmatprep.subr.bf16.mxu0 0
        %479 = vmatpush1.bf16.msra.mxu0 0
        %480 = vmatprep.subr.bf16.mxu0 0
        %481 = vmatpush1.bf16.msra.mxu0 0
        %482 = vmatprep.subr.bf16.mxu0 0
        %483 = vmatpush1.bf16.msra.mxu0 0
        %484 = vmatprep.subr.bf16.mxu0 0
        %485 = vmatpush1.bf16.msra.mxu0 0
        %486 = vmatprep.subr.bf16.mxu0 0
        %487 = vmatpush1.bf16.msra.mxu0 0
        %488 = vmatprep.subr.bf16.mxu0 0
        %489 = vmatpush1.bf16.msra.mxu0 0
        %490 = vmatprep.subr.bf16.mxu0 0
        %491 = vmatpush1.bf16.msra.mxu0 0
        %492 = vmatprep.subr.bf16.mxu0 0
        %493 = vmatpush1.bf16.msra.mxu0 0
        %494 = vmatprep.subr.bf16.mxu0 0
        %495 = vmatpush1.bf16.msra.mxu0 0
        %496 = vmatprep.subr.bf16.mxu0 0
        %497 = vmatpush1.bf16.msra.mxu0 0
        %498 = vmatprep.subr.bf16.mxu0 0
        %499 = vmatpush1.bf16.msra.mxu0 0
        %500 = vmatprep.mubr.bf16.mxu0 0
        %501 = vmatmul.mubr.bf16.gmra.mrb[0].mxu0 %v466
        %v502 = vpop.f32.mrb[0].mxu0
        %v503 = vadd.f32 %v453, %v502
        %v504 = vpop.f32.mrb[0].mxu0
        %v505 = vpop.f32.mrb[0].mxu0
        %v506 = vpop.f32.mrb[0].mxu0
        %507 = vdwg.mxu0
        %v508 = vld [vmem:[%s5] sm:$0x1]
        %v510 = vlaneseq
        %v511 = vshrl.u32 %v510, 7
        %v512 = vsub.s32 0, %v511
        %v513 = vrot.slane %v508, %v512
        %v515 = vadd.f32 %v503, %v513
        %v516 = vsel %vm414, %v515, -inf
        %517 = vmax.xlane.f32.xlu0 %v516
        %v518 = vpop.xlane.xlu0 %517
        %v519 = vsub.f32 %v515, %v518
        %v520 = vmul.f32 %v519, 1.442695
        %v521 = vpow.pop %v520
        %v522 = vsel %vm414, %v521, 0.0
        %523 = vadd.xlane.f32.xlu0 %v522
        %v524 = vpop.xlane.xlu0 %523
        %v525 = vrcp.pop %v524
        %v526 = vmul.f32 %v521, %v525
        %vm527 = vcmask 523520
        %v528 = vsel %vm527, %v515, -inf
        %529 = vmax.xlane.f32.xlu0 %v528
        %v530 = vpop.xlane.xlu0 %529
        %v531 = vsub.f32 %v515, %v530
        %v532 = vmul.f32 %v531, 1.442695
        %v533 = vpow.pop %v532
        %535 = vrot.lane.b32.xlu0 %v533, 96
        %v536 = vpop.permute.xlu0 %535
        %v538 = vsel %vm414, %v536, 0.0
        %539 = vadd.xlane.f32.xlu0 %v538
        %v540 = vpop.xlane.xlu0 %539
        %v541 = vrcp.pop %v540
        %v542 = vmul.f32 %v533, %v541
        %v543 = vtanh.pop %v515
        %vm544 = vcmask 1048320
        %v545 = vsel %vm544, %v515, -inf
        %546 = vmax.xlane.f32.xlu0 %v545
        %v547 = vpop.xlane.xlu0 %546
        %v548 = vsub.f32 %v515, %v547
        %v549 = vmul.f32 %v548, 1.442695
        %v550 = vpow.pop %v549
        %552 = vrot.lane.b32.xlu0 %v550, 32
        %v553 = vpop.permute.xlu0 %552
        %v555 = vsel %vm414, %v553, 0.0
        %556 = vadd.xlane.f32.xlu0 %v555
        %v557 = vpop.xlane.xlu0 %556
        %v558 = vrcp.pop %v557
        %v559 = vmul.f32 %v550, %v558
        %v560 = vld [vmem:[%s341] sm:$0xff]
        %v561 = vmul.f32 %v560, %v526
        %563 = vrot.lane.b32.xlu0 %v543, 96
        %v564 = vpop.permute.xlu0 %563
        %v566 = vmul.f32 %v542, %v564
        %568 = vrot.lane.b32.xlu0 %v566, 96
        %v569 = vpop.permute.xlu0 %568
        %v571 = vadd.f32 %v561, %v569
        %v572 = vtanh.pop %v571
        %574 = vrot.lane.b32.xlu0 %v559, 32
        %v575 = vpop.permute.xlu0 %574
        %v577 = vmul.f32 %v572, %v575
        %578 = vst.msk [vmem:[%s383] sm:$0xff] %vm414, %v577
        %579 = vst.msk [vmem:[%s390] sm:$0xff] %vm414, %v571
        %s580 = sand.u32 %s181, 1
        %s581 = scalar_lea.sflag [#allocation4], %s580
        %s582 = sand.u32 %s181, 1
        %s583 = smul.addr %s582, 8
        %s584 = scalar_lea.vmem [#allocation10], %s583
        %s585 = sand.u32 %s207, 1
        %s586 = scalar_lea.sflag [#allocation12], %s585
        %s587 = sand.u32 %s207, 1
        %s588 = smul.addr %s587, 8
        %s589 = scalar_lea.vmem [#allocation11], %s588
        // Predicated region
        $region61: #{tpu_custom_call.1} parent=43 // pred_check
          %p590 = pneg %p191
        $region62: #{tpu_custom_call.1} parent=43 // pred_check_branch
          %592 = sbr.rel (%p590) target = $region64
        $region63: #{tpu_custom_call.1} parent=43 // pred_region
          %s594 = ssub.s32 128, 128
          %595 = vsyncadd %s581, %s594
          %s596 = smul.addr %s32, 128
          %s597 = scalar_lea.hbm %s6, %s596
          %s599 = sshll.u32 %s584, 4
          %s600 = int_to_ptr.vmem [resolvable:$true] %s599
          %602 = dma.vmem_to_hbm [thread:$0]  %s600, 128, %s597, %s581
        $region64: #{tpu_custom_call.1} parent=43 // pred_fallthru
          _
        // Predicated region
        $region65: #{tpu_custom_call.1} parent=43 // pred_check
          %p603 = pneg %p217
        $region66: #{tpu_custom_call.1} parent=43 // pred_check_branch
          %605 = sbr.rel (%p603) target = $region68
        $region67: #{tpu_custom_call.1} parent=43 // pred_region
          %s607 = ssub.s32 128, 128
          %608 = vsyncadd %s586, %s607
          %s609 = smul.addr %s32, 128
          %s610 = scalar_lea.hbm %s7, %s609
          %s612 = sshll.u32 %s589, 4
          %s613 = int_to_ptr.vmem [resolvable:$true] %s612
          %615 = dma.vmem_to_hbm [thread:$0]  %s613, 128, %s610, %s586
        $region68: #{tpu_custom_call.1} parent=43 // pred_fallthru
          _
      $region44: #{tpu_custom_call.1} parent=5 // pred_fallthru
        _
      %p616 = scmp.le.s32.totalorder 2, %s27
      // Predicated region
      $region69: #{tpu_custom_call.1} parent=5 // pred_check
        %p617 = pneg %p616
      $region70: #{tpu_custom_call.1} parent=5 // pred_check_branch
        %619 = sbr.rel (%p617) target = $region72
      $region71: #{tpu_custom_call.1} parent=5 // pred_region
        %s620 = ssub.s32 %s27, 2
        // Predicated region
        $region73: #{tpu_custom_call.1} parent=71 // pred_check
          %p621 = pneg %p197
        $region74: #{tpu_custom_call.1} parent=71 // pred_check_branch
          %623 = sbr.rel (%p621) target = $region76
        $region75: #{tpu_custom_call.1} parent=71 // pred_region
          %s624 = sand.u32 %s182, 1
          %s625 = scalar_lea.sflag [#allocation4], %s624
          %s626 = sand.u32 %s182, 1
          %s627 = smul.addr %s626, 8
          %s628 = scalar_lea.vmem [#allocation10], %s627
          %629 = dma.done %s625, 128
        $region76: #{tpu_custom_call.1} parent=71 // pred_fallthru
          _
        // Predicated region
        $region77: #{tpu_custom_call.1} parent=71 // pred_check
          %p630 = pneg %p223
        $region78: #{tpu_custom_call.1} parent=71 // pred_check_branch
          %632 = sbr.rel (%p630) target = $region80
        $region79: #{tpu_custom_call.1} parent=71 // pred_region
          %s633 = sand.u32 %s208, 1
          %s634 = scalar_lea.sflag [#allocation12], %s633
          %s635 = sand.u32 %s208, 1
          %s636 = smul.addr %s635, 8
          %s637 = scalar_lea.vmem [#allocation11], %s636
          %638 = dma.done %s634, 128
        $region80: #{tpu_custom_call.1} parent=71 // pred_fallthru
          _
      $region72: #{tpu_custom_call.1} parent=5 // pred_fallthru
        _
    $region6: #{tpu_custom_call.1} parent=1 // loop_footer
      %s31 = sadd.s32 1, %s27
    $region7: #{tpu_custom_call.1} parent=1 // loop_footer_branch
      %26 = sbr.rel target = $region3
    $region8: #{tpu_custom_call.1} parent=1 // loop_exit
      _
    %639 = vsyncpa [#allocation3], 1
    %s640 = scalar_lea.sflag [#allocation3], 1
    %641 = vsyncpa %s640, 1
    %642 = vsyncpa [#allocation6], 1
    %s643 = scalar_lea.sflag [#allocation6], 1
    %644 = vsyncpa %s643, 1
    %645 = vsyncpa [#allocation9], 1
    %646 = vsyncpa [#allocation4], 1
    %s647 = scalar_lea.sflag [#allocation4], 1
    %648 = vsyncpa %s647, 1
    %649 = vsyncpa [#allocation12], 1
    %s650 = scalar_lea.sflag [#allocation12], 1
    %651 = vsyncpa %s650, 1

</llo_original>
